<compile_context>
chip_gen: v5e
topology: v5e:2x2
jax: 0.10.0
libtpu: 0.0.40
codegen_flags: <defaults>
</compile_context>

<pallas_src>
import math
import functools

import jax
import jax.numpy as jnp
from jax import lax
from jax.experimental import pallas as pl
from jax.experimental.pallas import tpu as pltpu

# ----------------------------- config ---------------------------------------
VOCAB_SIZE = 128
BLOCK_SIZE = 16      # max sequence length
N_LAYER    = 2
N_HEAD     = 2
N_EMBD     = 32
DROPOUT    = 0.0     # eval path -> identity
LN_EPS     = 1e-5


# ----------------------------- kernel ---------------------------------------
def _layernorm(v, w_row, b_row):
    mu = jnp.mean(v, axis=-1, keepdims=True)
    var = jnp.mean((v - mu) ** 2, axis=-1, keepdims=True)
    return (v - mu) * lax.rsqrt(var + LN_EPS) * w_row + b_row


def gpt_fused_kernel(x_ref, mask_ref, vecs_ref, bqkv_ref, bfc_ref,
                     wqkv_ref, wproj_ref, wfc_ref, wfc2_ref,
                     lnf_ref, wteT_ref,
                     o_ref,
                     *, n_layer, n_head, seq_len, batch):
    """Whole GPT forward in one invocation (no grid, layers unrolled).

    x_ref    : (B*T, C) f32 embeddings
    mask_ref : (B*T, B*T) f32 additive block-diagonal causal bias (0 / -1e30)
    vecs_ref : (L, 6, C) f32  [ln1_w, ln1_b, b_proj, ln2_w, ln2_b, b_fc2]
    bqkv_ref : (L, 1, 3C) f32 fused qkv bias (q-third pre-scaled)
    bfc_ref  : (L, 1, 4C) f32
    wqkv_ref : (L, C, 3C) bf16 ; wproj_ref (L, C, C) ; wfc_ref (L, C, 4C) ;
    wfc2_ref : (L, 4C, C) bf16
    lnf_ref  : (2, C) f32  [lnf_w ; lnf_b]
    wteT_ref : (C, V) bf16 tied lm_head
    o_ref    : (B, V) f32 last-token logits
    """
    bf16 = jnp.bfloat16
    x = x_ref[...]                                   # (N, C) f32 residual
    mask = mask_ref[...]                             # (N, N) f32 additive
    N, C = x.shape
    hd = C // n_head
    gelu_c = math.sqrt(2.0 / math.pi)

    for l in range(n_layer):                         # static unroll (L small)
        vecs = vecs_ref[l]                           # (6, C) f32
        ln1_w, ln1_b = vecs[0:1], vecs[1:2]
        b_proj       = vecs[2:3]
        ln2_w, ln2_b = vecs[3:4], vecs[4:5]
        b_fc2        = vecs[5:6]
        b_qkv = bqkv_ref[l]                          # (1, 3C) f32
        b_fc  = bfc_ref[l]                           # (1, 4C) f32

        # ---------------- attention ----------------
        h = _layernorm(x, ln1_w, ln1_b)                              # (N, C) f32
        qkv = jnp.dot(h.astype(bf16), wqkv_ref[l],
                      preferred_element_type=jnp.float32) + b_qkv    # (N, 3C)

        y_heads = []
        for hh in range(n_head):                     # static unroll (H small)
            q_h = qkv[:, hh * hd:(hh + 1) * hd]                       # (N, hd)
            k_h = qkv[:, C + hh * hd:C + (hh + 1) * hd]
            v_h = qkv[:, 2 * C + hh * hd:2 * C + (hh + 1) * hd]
            att = lax.dot_general(q_h.astype(bf16), k_h.astype(bf16),
                                  (((1,), (1,)), ((), ())),
                                  preferred_element_type=jnp.float32)  # (N, N)
            att = att + mask                          # block-diag causal bias
            att = att - jnp.max(att, axis=-1, keepdims=True)
            p = jnp.exp(att)
            p = p * pl.reciprocal(jnp.sum(p, axis=-1, keepdims=True),
                                  approx=True)
            y_heads.append(jnp.dot(p.astype(bf16), v_h.astype(bf16),
                                   preferred_element_type=jnp.float32))  # (N, hd)

        y_cat = jnp.concatenate(y_heads, axis=-1)                     # (N, C)
        attn_out = jnp.dot(y_cat.astype(bf16), wproj_ref[l],
                           preferred_element_type=jnp.float32) + b_proj
        x = x + attn_out                                              # residual 1

        # ---------------- MLP ----------------
        h2 = _layernorm(x, ln2_w, ln2_b)
        a = jnp.dot(h2.astype(bf16), wfc_ref[l],
                    preferred_element_type=jnp.float32) + b_fc        # (N, 4C)
        g = 0.5 * a * (1.0 + jnp.tanh(gelu_c * (a + 0.044715 * a * a * a)))
        m = jnp.dot(g.astype(bf16), wfc2_ref[l],
                    preferred_element_type=jnp.float32) + b_fc2       # (N, C)
        x = x + m                                                     # residual 2

    # -------- final LN + tied lm_head on last-token rows only --------
    last_rows = [x[b * seq_len + seq_len - 1: b * seq_len + seq_len, :]
                 for b in range(batch)]
    x_last = jnp.concatenate(last_rows, axis=0)                       # (B, C)
    lnf = lnf_ref[...]
    hf = _layernorm(x_last, lnf[0:1], lnf[1:2])
    o_ref[...] = jnp.dot(hf.astype(bf16), wteT_ref[...],
                         preferred_element_type=jnp.float32)          # (B, V)


# ----------------------------- wrapper ---------------------------------------
def run_gpt_fused(x_flat, mask_bias, fused, seq_len, batch):
    """x_flat: (B*T, C) f32 embeddings. Returns last-token logits (B, V)."""
    V = fused["wteT"].shape[1]
    kernel = functools.partial(gpt_fused_kernel, n_layer=N_LAYER, n_head=N_HEAD,
                               seq_len=seq_len, batch=batch)
    return pl.pallas_call(
        kernel,
        out_shape=jax.ShapeDtypeStruct((batch, V), jnp.float32),
        compiler_params=pltpu.CompilerParams(vmem_limit_bytes=32 * 1024 * 1024),
    )(x_flat, mask_bias,
      fused["vecs"], fused["b_qkv"], fused["b_fc"],
      fused["w_qkv"], fused["w_proj"], fused["w_fc"], fused["w_fc2"],
      fused["lnf"], fused["wteT"])


@jax.jit
def gpt_forward(fused, idx):
    """idx: (B, T) int32 token ids. Returns logits (B, 1, vocab) — matches the
    PyTorch targets=None inference path."""
    B, T = idx.shape
    assert T <= BLOCK_SIZE
    C = N_EMBD
    N = B * T

    pos = jnp.arange(T, dtype=jnp.int32)
    tok_emb = jnp.take(fused["wte"], idx, axis=0)                # (B, T, C)
    pos_emb = jnp.take(fused["wpe"], pos, axis=0)                # (T, C)
    x = (tok_emb + pos_emb[None, :, :]).reshape(N, C)            # dropout(0)=id

    # block-diagonal causal additive bias over the folded batch (built once
    # outside the kernel, constant across layers)
    row = jnp.arange(N, dtype=jnp.int32)[:, None]
    col = jnp.arange(N, dtype=jnp.int32)[None, :]
    allowed = (row // T == col // T) & (row >= col)
    mask_bias = jnp.where(allowed, 0.0, -1e30).astype(jnp.float32)

    logits_last = run_gpt_fused(x, mask_bias, fused, seq_len=T, batch=B)  # (B, V)
    return logits_last[:, None, :]                               # (B, 1, V)


# ----------------------------- parameter init --------------------------------
def init_params(key):
    """Raw per-layer parameters, mirroring the PyTorch init scheme."""
    std = 0.02
    proj_std = 0.02 / math.sqrt(2 * N_LAYER)
    keys = list(jax.random.split(key, 2 + 6 * N_LAYER))
    k = iter(keys)

    params = {
        "wte": std * jax.random.normal(next(k), (VOCAB_SIZE, N_EMBD), jnp.float32),
        "wpe": std * jax.random.normal(next(k), (BLOCK_SIZE, N_EMBD), jnp.float32),
        "lnf_w": jnp.ones((1, N_EMBD), jnp.float32),
        "lnf_b": jnp.zeros((1, N_EMBD), jnp.float32),
        "layers": [],
    }
    for _ in range(N_LAYER):
        params["layers"].append({
            "ln1_w": jnp.ones((1, N_EMBD), jnp.float32),
            "ln1_b": jnp.zeros((1, N_EMBD), jnp.float32),
            "w_q": std * jax.random.normal(next(k), (N_EMBD, N_EMBD), jnp.float32),
            "w_k": std * jax.random.normal(next(k), (N_EMBD, N_EMBD), jnp.float32),
            "w_v": std * jax.random.normal(next(k), (N_EMBD, N_EMBD), jnp.float32),
            "b_q": jnp.zeros((1, N_EMBD), jnp.float32),
            "b_k": jnp.zeros((1, N_EMBD), jnp.float32),
            "b_v": jnp.zeros((1, N_EMBD), jnp.float32),
            "w_attn_proj": proj_std * jax.random.normal(next(k), (N_EMBD, N_EMBD), jnp.float32),
            "b_attn_proj": jnp.zeros((1, N_EMBD), jnp.float32),
            "ln2_w": jnp.ones((1, N_EMBD), jnp.float32),
            "ln2_b": jnp.zeros((1, N_EMBD), jnp.float32),
            "w_fc": std * jax.random.normal(next(k), (N_EMBD, 4 * N_EMBD), jnp.float32),
            "b_fc": jnp.zeros((1, 4 * N_EMBD), jnp.float32),
            "w_mlp_proj": proj_std * jax.random.normal(next(k), (4 * N_EMBD, N_EMBD), jnp.float32),
            "b_mlp_proj": jnp.zeros((1, N_EMBD), jnp.float32),
        })
    return params


def prepare_fused_params(p):
    """One-time host-side prep: fuse Wq|Wk|Wv, fold 1/sqrt(hd) into the q part,
    pack the tiny per-layer vectors into slabs, bf16-cast matmul weights,
    [L]-stack everything, hoist wte.T for the tied lm_head."""
    C, H = N_EMBD, N_HEAD
    hd = C // H
    scale = 1.0 / math.sqrt(hd)
    bf16 = jnp.bfloat16

    vecs, b_qkv, b_fc = [], [], []
    w_qkv, w_proj, w_fc, w_fc2 = [], [], [], []
    for lp in p["layers"]:
        vecs.append(jnp.concatenate(
            [lp["ln1_w"], lp["ln1_b"], lp["b_attn_proj"],
             lp["ln2_w"], lp["ln2_b"], lp["b_mlp_proj"]], axis=0))          # (6, C)
        b_qkv.append(jnp.concatenate(
            [lp["b_q"] * scale, lp["b_k"], lp["b_v"]], axis=1))             # (1, 3C)
        b_fc.append(lp["b_fc"])                                             # (1, 4C)
        w_qkv.append(jnp.concatenate(
            [lp["w_q"] * scale, lp["w_k"], lp["w_v"]], axis=1).astype(bf16))  # (C, 3C)
        w_proj.append(lp["w_attn_proj"].astype(bf16))                       # (C, C)
        w_fc.append(lp["w_fc"].astype(bf16))                                # (C, 4C)
        w_fc2.append(lp["w_mlp_proj"].astype(bf16))                         # (4C, C)

    return {
        "vecs": jnp.stack(vecs, axis=0),
        "b_qkv": jnp.stack(b_qkv, axis=0),
        "b_fc": jnp.stack(b_fc, axis=0),
        "w_qkv": jnp.stack(w_qkv, axis=0),
        "w_proj": jnp.stack(w_proj, axis=0),
        "w_fc": jnp.stack(w_fc, axis=0),
        "w_fc2": jnp.stack(w_fc2, axis=0),
        "lnf": jnp.concatenate([p["lnf_w"], p["lnf_b"]], axis=0),           # (2, C)
        "wte": p["wte"],
        "wpe": p["wpe"],
        "wteT": p["wte"].T.astype(bf16),                                    # (C, V)
    }


# ----------------------------- pure-JAX reference ----------------------------
def gpt_forward_reference(p, idx):
    """Plain-JAX f32 reference mirroring the PyTorch module (targets=None)."""
    B, T = idx.shape
    C, H = N_EMBD, N_HEAD
    hd = C // H

    def ln(v, w, b):
        mu = v.mean(-1, keepdims=True)
        var = ((v - mu) ** 2).mean(-1, keepdims=True)
        return (v - mu) / jnp.sqrt(var + LN_EPS) * w + b

    x = jnp.take(p["wte"], idx, axis=0) + jnp.take(p["wpe"], jnp.arange(T), axis=0)[None]
    mask = jnp.tril(jnp.ones((T, T), bool))
    for lp in p["layers"]:
        h = ln(x, lp["ln1_w"], lp["ln1_b"])
        q = (h @ lp["w_q"] + lp["b_q"]).reshape(B, T, H, hd).transpose(0, 2, 1, 3)
        k = (h @ lp["w_k"] + lp["b_k"]).reshape(B, T, H, hd).transpose(0, 2, 1, 3)
        v = (h @ lp["w_v"] + lp["b_v"]).reshape(B, T, H, hd).transpose(0, 2, 1, 3)
        att = (q @ jnp.swapaxes(k, -1, -2)) / math.sqrt(hd)
        att = jnp.where(mask, att, -jnp.inf)
        att = jax.nn.softmax(att, axis=-1)
        y = (att @ v).transpose(0, 2, 1, 3).reshape(B, T, C)
        x = x + y @ lp["w_attn_proj"] + lp["b_attn_proj"]
        h2 = ln(x, lp["ln2_w"], lp["ln2_b"])
        a = h2 @ lp["w_fc"] + lp["b_fc"]
        g = 0.5 * a * (1.0 + jnp.tanh(math.sqrt(2.0 / math.pi) * (a + 0.044715 * a ** 3)))
        x = x + g @ lp["w_mlp_proj"] + lp["b_mlp_proj"]
    x = ln(x, p["lnf_w"], p["lnf_b"])
    return x[:, -1:, :] @ p["wte"].T


# ----------------------------- main -------------------------------------------
if __name__ == "__main__":
    key = jax.random.PRNGKey(0)
    pkey, dkey = jax.random.split(key)
    raw_params = init_params(pkey)
    fused = prepare_fused_params(raw_params)

    B, T = 2, 8
    idx = jax.random.randint(dkey, (B, T), 0, VOCAB_SIZE, dtype=jnp.int32)

    logits = gpt_forward(fused, idx)
    logits = jax.block_until_ready(logits)

    assert logits.shape == (B, 1, VOCAB_SIZE)
    assert bool(jnp.all(jnp.isfinite(logits)))

    # numerical sanity check vs plain-JAX f32 reference (bf16 MXU operands ->
    # loose-but-comfortable tolerance for this magnitude of logits)
    ref = gpt_forward_reference(raw_params, idx)
    max_err = float(jnp.max(jnp.abs(logits - ref)))
    assert max_err < 5e-2, f"max abs err vs reference: {max_err}"

    print("KERNEL_OK")
</pallas_src>

<mosaic_0001>
module attributes {stable_mosaic.version = 11 : i64} {
  func.func @gpt_fused_kernel(%arg0: memref<16x32xf32, #tpu.memory_space<vmem>>, %arg1: memref<16x16xf32, #tpu.memory_space<vmem>>, %arg2: memref<2x6x32xf32, #tpu.memory_space<vmem>>, %arg3: memref<2x1x96xf32, #tpu.memory_space<vmem>>, %arg4: memref<2x1x128xf32, #tpu.memory_space<vmem>>, %arg5: memref<2x32x96xbf16, #tpu.memory_space<vmem>>, %arg6: memref<2x32x32xbf16, #tpu.memory_space<vmem>>, %arg7: memref<2x32x128xbf16, #tpu.memory_space<vmem>>, %arg8: memref<2x128x32xbf16, #tpu.memory_space<vmem>>, %arg9: memref<2x32xf32, #tpu.memory_space<vmem>>, %arg10: memref<32x128xbf16, #tpu.memory_space<vmem>>, %arg11: memref<2x128xf32, #tpu.memory_space<vmem>>) attributes {dimension_semantics = [], scalar_prefetch = 0 : i64, scratch_operands = 0 : i64, tpu.core_type = #tpu.core_type<tc>} {
    %c0 = arith.constant 0 : index
    %c0_0 = arith.constant 0 : index
    %0 = vector.load %arg0[%c0, %c0_0] : memref<16x32xf32, #tpu.memory_space<vmem>>, vector<16x32xf32>
    %c0_1 = arith.constant 0 : index
    %c0_2 = arith.constant 0 : index
    %1 = vector.load %arg1[%c0_1, %c0_2] : memref<16x16xf32, #tpu.memory_space<vmem>>, vector<16x16xf32>
    %c0_3 = arith.constant 0 : index
    %c0_4 = arith.constant 0 : index
    %c0_5 = arith.constant 0 : index
    %2 = vector.load %arg2[%c0_3, %c0_4, %c0_5] : memref<2x6x32xf32, #tpu.memory_space<vmem>>, vector<1x6x32xf32>
    %3 = vector.shape_cast %2 : vector<1x6x32xf32> to vector<6x32xf32>
    %4 = vector.extract_strided_slice %3 {offsets = [0, 0], sizes = [1, 32], strides = [1, 1]} : vector<6x32xf32> to vector<1x32xf32>
    %5 = vector.extract_strided_slice %3 {offsets = [1, 0], sizes = [1, 32], strides = [1, 1]} : vector<6x32xf32> to vector<1x32xf32>
    %6 = vector.extract_strided_slice %3 {offsets = [2, 0], sizes = [1, 32], strides = [1, 1]} : vector<6x32xf32> to vector<1x32xf32>
    %7 = vector.extract_strided_slice %3 {offsets = [3, 0], sizes = [1, 32], strides = [1, 1]} : vector<6x32xf32> to vector<1x32xf32>
    %8 = vector.extract_strided_slice %3 {offsets = [4, 0], sizes = [1, 32], strides = [1, 1]} : vector<6x32xf32> to vector<1x32xf32>
    %9 = vector.extract_strided_slice %3 {offsets = [5, 0], sizes = [1, 32], strides = [1, 1]} : vector<6x32xf32> to vector<1x32xf32>
    %c0_6 = arith.constant 0 : index
    %c0_7 = arith.constant 0 : index
    %c0_8 = arith.constant 0 : index
    %10 = vector.load %arg3[%c0_6, %c0_7, %c0_8] : memref<2x1x96xf32, #tpu.memory_space<vmem>>, vector<1x1x96xf32>
    %11 = vector.shape_cast %10 : vector<1x1x96xf32> to vector<1x96xf32>
    %c0_9 = arith.constant 0 : index
    %c0_10 = arith.constant 0 : index
    %c0_11 = arith.constant 0 : index
    %12 = vector.load %arg4[%c0_9, %c0_10, %c0_11] : memref<2x1x128xf32, #tpu.memory_space<vmem>>, vector<1x1x128xf32>
    %13 = vector.shape_cast %12 : vector<1x1x128xf32> to vector<1x128xf32>
    %cst = arith.constant dense<0.000000e+00> : vector<16xf32>
    %14 = vector.multi_reduction <add>, %0, %cst [1] : vector<16x32xf32> to vector<16xf32>
    %15 = vector.shape_cast %14 : vector<16xf32> to vector<16x1xf32>
    %cst_12 = arith.constant 3.200000e+01 : f32
    %16 = vector.broadcast %cst_12 : f32 to vector<16x1xf32>
    %17 = arith.divf %15, %16 : vector<16x1xf32>
    %18 = vector.broadcast %17 : vector<16x1xf32> to vector<16x32xf32>
    %19 = arith.subf %0, %18 : vector<16x32xf32>
    %20 = arith.mulf %19, %19 : vector<16x32xf32>
    %cst_13 = arith.constant dense<0.000000e+00> : vector<16xf32>
    %21 = vector.multi_reduction <add>, %20, %cst_13 [1] : vector<16x32xf32> to vector<16xf32>
    %22 = vector.shape_cast %21 : vector<16xf32> to vector<16x1xf32>
    %cst_14 = arith.constant 3.200000e+01 : f32
    %23 = vector.broadcast %cst_14 : f32 to vector<16x1xf32>
    %24 = arith.divf %22, %23 : vector<16x1xf32>
    %25 = vector.broadcast %17 : vector<16x1xf32> to vector<16x32xf32>
    %26 = arith.subf %0, %25 : vector<16x32xf32>
    %cst_15 = arith.constant 9.99999974E-6 : f32
    %27 = vector.broadcast %cst_15 : f32 to vector<16x1xf32>
    %28 = arith.addf %24, %27 : vector<16x1xf32>
    %29 = math.rsqrt %28 : vector<16x1xf32>
    %30 = vector.broadcast %29 : vector<16x1xf32> to vector<16x32xf32>
    %31 = arith.mulf %26, %30 : vector<16x32xf32>
    %32 = vector.broadcast %4 : vector<1x32xf32> to vector<16x32xf32>
    %33 = arith.mulf %31, %32 : vector<16x32xf32>
    %34 = vector.broadcast %5 : vector<1x32xf32> to vector<16x32xf32>
    %35 = arith.addf %33, %34 : vector<16x32xf32>
    %36 = arith.truncf %35 : vector<16x32xf32> to vector<16x32xbf16>
    %c0_16 = arith.constant 0 : index
    %c0_17 = arith.constant 0 : index
    %c0_18 = arith.constant 0 : index
    %37 = vector.load %arg5[%c0_16, %c0_17, %c0_18] : memref<2x32x96xbf16, #tpu.memory_space<vmem>>, vector<1x32x96xbf16>
    %38 = vector.shape_cast %37 : vector<1x32x96xbf16> to vector<32x96xbf16>
    %cst_19 = arith.constant dense<0.000000e+00> : vector<16x96xf32>
    %39 = tpu.matmul %36, %38, %cst_19 {dimension_numbers = #tpu.dot_dimension_numbers<[1], [0], [0], [1], [0, 0, 1, 1], [], []>} : vector<16x32xbf16>, vector<32x96xbf16>, vector<16x96xf32> -> vector<16x96xf32>
    %40 = vector.broadcast %11 : vector<1x96xf32> to vector<16x96xf32>
    %41 = arith.addf %39, %40 : vector<16x96xf32>
    %42 = vector.extract_strided_slice %41 {offsets = [0, 0], sizes = [16, 16], strides = [1, 1]} : vector<16x96xf32> to vector<16x16xf32>
    %43 = vector.extract_strided_slice %41 {offsets = [0, 32], sizes = [16, 16], strides = [1, 1]} : vector<16x96xf32> to vector<16x16xf32>
    %44 = vector.extract_strided_slice %41 {offsets = [0, 64], sizes = [16, 16], strides = [1, 1]} : vector<16x96xf32> to vector<16x16xf32>
    %45 = arith.truncf %42 : vector<16x16xf32> to vector<16x16xbf16>
    %46 = arith.truncf %43 : vector<16x16xf32> to vector<16x16xbf16>
    %cst_20 = arith.constant dense<0.000000e+00> : vector<16x16xf32>
    %47 = tpu.matmul %45, %46, %cst_20 {dimension_numbers = #tpu.dot_dimension_numbers<[1], [1], [0], [0], [0, 0, 1, 0], [], []>} : vector<16x16xbf16>, vector<16x16xbf16>, vector<16x16xf32> -> vector<16x16xf32>
    %48 = arith.addf %47, %1 : vector<16x16xf32>
    %cst_21 = arith.constant dense<0xFF800000> : vector<16xf32>
    %49 = vector.multi_reduction <maximumf>, %48, %cst_21 [1] : vector<16x16xf32> to vector<16xf32>
    %50 = vector.shape_cast %49 : vector<16xf32> to vector<16x1xf32>
    %51 = vector.broadcast %50 : vector<16x1xf32> to vector<16x16xf32>
    %52 = arith.subf %48, %51 : vector<16x16xf32>
    %53 = math.exp %52 : vector<16x16xf32>
    %cst_22 = arith.constant dense<0.000000e+00> : vector<16xf32>
    %54 = vector.multi_reduction <add>, %53, %cst_22 [1] : vector<16x16xf32> to vector<16xf32>
    %55 = vector.shape_cast %54 : vector<16xf32> to vector<16x1xf32>
    %56 = tpu.reciprocal %55 {approx = true} : vector<16x1xf32> -> vector<16x1xf32>
    %57 = vector.broadcast %56 : vector<16x1xf32> to vector<16x16xf32>
    %58 = arith.mulf %53, %57 : vector<16x16xf32>
    %59 = arith.truncf %58 : vector<16x16xf32> to vector<16x16xbf16>
    %60 = arith.truncf %44 : vector<16x16xf32> to vector<16x16xbf16>
    %cst_23 = arith.constant dense<0.000000e+00> : vector<16x16xf32>
    %61 = tpu.matmul %59, %60, %cst_23 {dimension_numbers = #tpu.dot_dimension_numbers<[1], [0], [0], [1], [0, 0, 1, 1], [], []>} : vector<16x16xbf16>, vector<16x16xbf16>, vector<16x16xf32> -> vector<16x16xf32>
    %62 = vector.extract_strided_slice %41 {offsets = [0, 16], sizes = [16, 16], strides = [1, 1]} : vector<16x96xf32> to vector<16x16xf32>
    %63 = vector.extract_strided_slice %41 {offsets = [0, 48], sizes = [16, 16], strides = [1, 1]} : vector<16x96xf32> to vector<16x16xf32>
    %64 = vector.extract_strided_slice %41 {offsets = [0, 80], sizes = [16, 16], strides = [1, 1]} : vector<16x96xf32> to vector<16x16xf32>
    %65 = arith.truncf %62 : vector<16x16xf32> to vector<16x16xbf16>
    %66 = arith.truncf %63 : vector<16x16xf32> to vector<16x16xbf16>
    %cst_24 = arith.constant dense<0.000000e+00> : vector<16x16xf32>
    %67 = tpu.matmul %65, %66, %cst_24 {dimension_numbers = #tpu.dot_dimension_numbers<[1], [1], [0], [0], [0, 0, 1, 0], [], []>} : vector<16x16xbf16>, vector<16x16xbf16>, vector<16x16xf32> -> vector<16x16xf32>
    %68 = arith.addf %67, %1 : vector<16x16xf32>
    %cst_25 = arith.constant dense<0xFF800000> : vector<16xf32>
    %69 = vector.multi_reduction <maximumf>, %68, %cst_25 [1] : vector<16x16xf32> to vector<16xf32>
    %70 = vector.shape_cast %69 : vector<16xf32> to vector<16x1xf32>
    %71 = vector.broadcast %70 : vector<16x1xf32> to vector<16x16xf32>
    %72 = arith.subf %68, %71 : vector<16x16xf32>
    %73 = math.exp %72 : vector<16x16xf32>
    %cst_26 = arith.constant dense<0.000000e+00> : vector<16xf32>
    %74 = vector.multi_reduction <add>, %73, %cst_26 [1] : vector<16x16xf32> to vector<16xf32>
    %75 = vector.shape_cast %74 : vector<16xf32> to vector<16x1xf32>
    %76 = tpu.reciprocal %75 {approx = true} : vector<16x1xf32> -> vector<16x1xf32>
    %77 = vector.broadcast %76 : vector<16x1xf32> to vector<16x16xf32>
    %78 = arith.mulf %73, %77 : vector<16x16xf32>
    %79 = arith.truncf %78 : vector<16x16xf32> to vector<16x16xbf16>
    %80 = arith.truncf %64 : vector<16x16xf32> to vector<16x16xbf16>
    %cst_27 = arith.constant dense<0.000000e+00> : vector<16x16xf32>
    %81 = tpu.matmul %79, %80, %cst_27 {dimension_numbers = #tpu.dot_dimension_numbers<[1], [0], [0], [1], [0, 0, 1, 1], [], []>} : vector<16x16xbf16>, vector<16x16xbf16>, vector<16x16xf32> -> vector<16x16xf32>
    %82 = tpu.concatenate %61, %81 in 1 : vector<16x16xf32>, vector<16x16xf32> -> vector<16x32xf32>
    %83 = arith.truncf %82 : vector<16x32xf32> to vector<16x32xbf16>
    %c0_28 = arith.constant 0 : index
    %c0_29 = arith.constant 0 : index
    %c0_30 = arith.constant 0 : index
    %84 = vector.load %arg6[%c0_28, %c0_29, %c0_30] : memref<2x32x32xbf16, #tpu.memory_space<vmem>>, vector<1x32x32xbf16>
    %85 = vector.shape_cast %84 : vector<1x32x32xbf16> to vector<32x32xbf16>
    %cst_31 = arith.constant dense<0.000000e+00> : vector<16x32xf32>
    %86 = tpu.matmul %83, %85, %cst_31 {dimension_numbers = #tpu.dot_dimension_numbers<[1], [0], [0], [1], [0, 0, 1, 1], [], []>} : vector<16x32xbf16>, vector<32x32xbf16>, vector<16x32xf32> -> vector<16x32xf32>
    %87 = vector.broadcast %6 : vector<1x32xf32> to vector<16x32xf32>
    %88 = arith.addf %86, %87 : vector<16x32xf32>
    %89 = arith.addf %0, %88 : vector<16x32xf32>
    %cst_32 = arith.constant dense<0.000000e+00> : vector<16xf32>
    %90 = vector.multi_reduction <add>, %89, %cst_32 [1] : vector<16x32xf32> to vector<16xf32>
    %91 = vector.shape_cast %90 : vector<16xf32> to vector<16x1xf32>
    %cst_33 = arith.constant 3.200000e+01 : f32
    %92 = vector.broadcast %cst_33 : f32 to vector<16x1xf32>
    %93 = arith.divf %91, %92 : vector<16x1xf32>
    %94 = vector.broadcast %93 : vector<16x1xf32> to vector<16x32xf32>
    %95 = arith.subf %89, %94 : vector<16x32xf32>
    %96 = arith.mulf %95, %95 : vector<16x32xf32>
    %cst_34 = arith.constant dense<0.000000e+00> : vector<16xf32>
    %97 = vector.multi_reduction <add>, %96, %cst_34 [1] : vector<16x32xf32> to vector<16xf32>
    %98 = vector.shape_cast %97 : vector<16xf32> to vector<16x1xf32>
    %cst_35 = arith.constant 3.200000e+01 : f32
    %99 = vector.broadcast %cst_35 : f32 to vector<16x1xf32>
    %100 = arith.divf %98, %99 : vector<16x1xf32>
    %101 = vector.broadcast %93 : vector<16x1xf32> to vector<16x32xf32>
    %102 = arith.subf %89, %101 : vector<16x32xf32>
    %cst_36 = arith.constant 9.99999974E-6 : f32
    %103 = vector.broadcast %cst_36 : f32 to vector<16x1xf32>
    %104 = arith.addf %100, %103 : vector<16x1xf32>
    %105 = math.rsqrt %104 : vector<16x1xf32>
    %106 = vector.broadcast %105 : vector<16x1xf32> to vector<16x32xf32>
    %107 = arith.mulf %102, %106 : vector<16x32xf32>
    %108 = vector.broadcast %7 : vector<1x32xf32> to vector<16x32xf32>
    %109 = arith.mulf %107, %108 : vector<16x32xf32>
    %110 = vector.broadcast %8 : vector<1x32xf32> to vector<16x32xf32>
    %111 = arith.addf %109, %110 : vector<16x32xf32>
    %112 = arith.truncf %111 : vector<16x32xf32> to vector<16x32xbf16>
    %c0_37 = arith.constant 0 : index
    %c0_38 = arith.constant 0 : index
    %c0_39 = arith.constant 0 : index
    %113 = vector.load %arg7[%c0_37, %c0_38, %c0_39] : memref<2x32x128xbf16, #tpu.memory_space<vmem>>, vector<1x32x128xbf16>
    %114 = vector.shape_cast %113 : vector<1x32x128xbf16> to vector<32x128xbf16>
    %cst_40 = arith.constant dense<0.000000e+00> : vector<16x128xf32>
    %115 = tpu.matmul %112, %114, %cst_40 {dimension_numbers = #tpu.dot_dimension_numbers<[1], [0], [0], [1], [0, 0, 1, 1], [], []>} : vector<16x32xbf16>, vector<32x128xbf16>, vector<16x128xf32> -> vector<16x128xf32>
    %116 = vector.broadcast %13 : vector<1x128xf32> to vector<16x128xf32>
    %117 = arith.addf %115, %116 : vector<16x128xf32>
    %cst_41 = arith.constant 5.000000e-01 : f32
    %118 = vector.broadcast %cst_41 : f32 to vector<16x128xf32>
    %119 = arith.mulf %118, %117 : vector<16x128xf32>
    %cst_42 = arith.constant 4.471500e-02 : f32
    %120 = vector.broadcast %cst_42 : f32 to vector<16x128xf32>
    %121 = arith.mulf %120, %117 : vector<16x128xf32>
    %122 = arith.mulf %121, %117 : vector<16x128xf32>
    %123 = arith.mulf %122, %117 : vector<16x128xf32>
    %124 = arith.addf %117, %123 : vector<16x128xf32>
    %cst_43 = arith.constant 0.797884583 : f32
    %125 = vector.broadcast %cst_43 : f32 to vector<16x128xf32>
    %126 = arith.mulf %125, %124 : vector<16x128xf32>
    %127 = math.tanh %126 : vector<16x128xf32>
    %cst_44 = arith.constant 1.000000e+00 : f32
    %128 = vector.broadcast %cst_44 : f32 to vector<16x128xf32>
    %129 = arith.addf %128, %127 : vector<16x128xf32>
    %130 = arith.mulf %119, %129 : vector<16x128xf32>
    %131 = arith.truncf %130 : vector<16x128xf32> to vector<16x128xbf16>
    %c0_45 = arith.constant 0 : index
    %c0_46 = arith.constant 0 : index
    %c0_47 = arith.constant 0 : index
    %132 = vector.load %arg8[%c0_45, %c0_46, %c0_47] : memref<2x128x32xbf16, #tpu.memory_space<vmem>>, vector<1x128x32xbf16>
    %133 = vector.shape_cast %132 : vector<1x128x32xbf16> to vector<128x32xbf16>
    %cst_48 = arith.constant dense<0.000000e+00> : vector<16x32xf32>
    %134 = tpu.matmul %131, %133, %cst_48 {dimension_numbers = #tpu.dot_dimension_numbers<[1], [0], [0], [1], [0, 0, 1, 1], [], []>} : vector<16x128xbf16>, vector<128x32xbf16>, vector<16x32xf32> -> vector<16x32xf32>
    %135 = vector.broadcast %9 : vector<1x32xf32> to vector<16x32xf32>
    %136 = arith.addf %134, %135 : vector<16x32xf32>
    %137 = arith.addf %89, %136 : vector<16x32xf32>
    %c1 = arith.constant 1 : index
    %c0_49 = arith.constant 0 : index
    %c0_50 = arith.constant 0 : index
    %138 = vector.load %arg2[%c1, %c0_49, %c0_50] : memref<2x6x32xf32, #tpu.memory_space<vmem>>, vector<1x6x32xf32>
    %139 = vector.shape_cast %138 : vector<1x6x32xf32> to vector<6x32xf32>
    %140 = vector.extract_strided_slice %139 {offsets = [0, 0], sizes = [1, 32], strides = [1, 1]} : vector<6x32xf32> to vector<1x32xf32>
    %141 = vector.extract_strided_slice %139 {offsets = [1, 0], sizes = [1, 32], strides = [1, 1]} : vector<6x32xf32> to vector<1x32xf32>
    %142 = vector.extract_strided_slice %139 {offsets = [2, 0], sizes = [1, 32], strides = [1, 1]} : vector<6x32xf32> to vector<1x32xf32>
    %143 = vector.extract_strided_slice %139 {offsets = [3, 0], sizes = [1, 32], strides = [1, 1]} : vector<6x32xf32> to vector<1x32xf32>
    %144 = vector.extract_strided_slice %139 {offsets = [4, 0], sizes = [1, 32], strides = [1, 1]} : vector<6x32xf32> to vector<1x32xf32>
    %145 = vector.extract_strided_slice %139 {offsets = [5, 0], sizes = [1, 32], strides = [1, 1]} : vector<6x32xf32> to vector<1x32xf32>
    %c1_51 = arith.constant 1 : index
    %c0_52 = arith.constant 0 : index
    %c0_53 = arith.constant 0 : index
    %146 = vector.load %arg3[%c1_51, %c0_52, %c0_53] : memref<2x1x96xf32, #tpu.memory_space<vmem>>, vector<1x1x96xf32>
    %147 = vector.shape_cast %146 : vector<1x1x96xf32> to vector<1x96xf32>
    %c1_54 = arith.constant 1 : index
    %c0_55 = arith.constant 0 : index
    %c0_56 = arith.constant 0 : index
    %148 = vector.load %arg4[%c1_54, %c0_55, %c0_56] : memref<2x1x128xf32, #tpu.memory_space<vmem>>, vector<1x1x128xf32>
    %149 = vector.shape_cast %148 : vector<1x1x128xf32> to vector<1x128xf32>
    %cst_57 = arith.constant dense<0.000000e+00> : vector<16xf32>
    %150 = vector.multi_reduction <add>, %137, %cst_57 [1] : vector<16x32xf32> to vector<16xf32>
    %151 = vector.shape_cast %150 : vector<16xf32> to vector<16x1xf32>
    %cst_58 = arith.constant 3.200000e+01 : f32
    %152 = vector.broadcast %cst_58 : f32 to vector<16x1xf32>
    %153 = arith.divf %151, %152 : vector<16x1xf32>
    %154 = vector.broadcast %153 : vector<16x1xf32> to vector<16x32xf32>
    %155 = arith.subf %137, %154 : vector<16x32xf32>
    %156 = arith.mulf %155, %155 : vector<16x32xf32>
    %cst_59 = arith.constant dense<0.000000e+00> : vector<16xf32>
    %157 = vector.multi_reduction <add>, %156, %cst_59 [1] : vector<16x32xf32> to vector<16xf32>
    %158 = vector.shape_cast %157 : vector<16xf32> to vector<16x1xf32>
    %cst_60 = arith.constant 3.200000e+01 : f32
    %159 = vector.broadcast %cst_60 : f32 to vector<16x1xf32>
    %160 = arith.divf %158, %159 : vector<16x1xf32>
    %161 = vector.broadcast %153 : vector<16x1xf32> to vector<16x32xf32>
    %162 = arith.subf %137, %161 : vector<16x32xf32>
    %cst_61 = arith.constant 9.99999974E-6 : f32
    %163 = vector.broadcast %cst_61 : f32 to vector<16x1xf32>
    %164 = arith.addf %160, %163 : vector<16x1xf32>
    %165 = math.rsqrt %164 : vector<16x1xf32>
    %166 = vector.broadcast %165 : vector<16x1xf32> to vector<16x32xf32>
    %167 = arith.mulf %162, %166 : vector<16x32xf32>
    %168 = vector.broadcast %140 : vector<1x32xf32> to vector<16x32xf32>
    %169 = arith.mulf %167, %168 : vector<16x32xf32>
    %170 = vector.broadcast %141 : vector<1x32xf32> to vector<16x32xf32>
    %171 = arith.addf %169, %170 : vector<16x32xf32>
    %172 = arith.truncf %171 : vector<16x32xf32> to vector<16x32xbf16>
    %c1_62 = arith.constant 1 : index
    %c0_63 = arith.constant 0 : index
    %c0_64 = arith.constant 0 : index
    %173 = vector.load %arg5[%c1_62, %c0_63, %c0_64] : memref<2x32x96xbf16, #tpu.memory_space<vmem>>, vector<1x32x96xbf16>
    %174 = vector.shape_cast %173 : vector<1x32x96xbf16> to vector<32x96xbf16>
    %cst_65 = arith.constant dense<0.000000e+00> : vector<16x96xf32>
    %175 = tpu.matmul %172, %174, %cst_65 {dimension_numbers = #tpu.dot_dimension_numbers<[1], [0], [0], [1], [0, 0, 1, 1], [], []>} : vector<16x32xbf16>, vector<32x96xbf16>, vector<16x96xf32> -> vector<16x96xf32>
    %176 = vector.broadcast %147 : vector<1x96xf32> to vector<16x96xf32>
    %177 = arith.addf %175, %176 : vector<16x96xf32>
    %178 = vector.extract_strided_slice %177 {offsets = [0, 0], sizes = [16, 16], strides = [1, 1]} : vector<16x96xf32> to vector<16x16xf32>
    %179 = vector.extract_strided_slice %177 {offsets = [0, 32], sizes = [16, 16], strides = [1, 1]} : vector<16x96xf32> to vector<16x16xf32>
    %180 = vector.extract_strided_slice %177 {offsets = [0, 64], sizes = [16, 16], strides = [1, 1]} : vector<16x96xf32> to vector<16x16xf32>
    %181 = arith.truncf %178 : vector<16x16xf32> to vector<16x16xbf16>
    %182 = arith.truncf %179 : vector<16x16xf32> to vector<16x16xbf16>
    %cst_66 = arith.constant dense<0.000000e+00> : vector<16x16xf32>
    %183 = tpu.matmul %181, %182, %cst_66 {dimension_numbers = #tpu.dot_dimension_numbers<[1], [1], [0], [0], [0, 0, 1, 0], [], []>} : vector<16x16xbf16>, vector<16x16xbf16>, vector<16x16xf32> -> vector<16x16xf32>
    %184 = arith.addf %183, %1 : vector<16x16xf32>
    %cst_67 = arith.constant dense<0xFF800000> : vector<16xf32>
    %185 = vector.multi_reduction <maximumf>, %184, %cst_67 [1] : vector<16x16xf32> to vector<16xf32>
    %186 = vector.shape_cast %185 : vector<16xf32> to vector<16x1xf32>
    %187 = vector.broadcast %186 : vector<16x1xf32> to vector<16x16xf32>
    %188 = arith.subf %184, %187 : vector<16x16xf32>
    %189 = math.exp %188 : vector<16x16xf32>
    %cst_68 = arith.constant dense<0.000000e+00> : vector<16xf32>
    %190 = vector.multi_reduction <add>, %189, %cst_68 [1] : vector<16x16xf32> to vector<16xf32>
    %191 = vector.shape_cast %190 : vector<16xf32> to vector<16x1xf32>
    %192 = tpu.reciprocal %191 {approx = true} : vector<16x1xf32> -> vector<16x1xf32>
    %193 = vector.broadcast %192 : vector<16x1xf32> to vector<16x16xf32>
    %194 = arith.mulf %189, %193 : vector<16x16xf32>
    %195 = arith.truncf %194 : vector<16x16xf32> to vector<16x16xbf16>
    %196 = arith.truncf %180 : vector<16x16xf32> to vector<16x16xbf16>
    %cst_69 = arith.constant dense<0.000000e+00> : vector<16x16xf32>
    %197 = tpu.matmul %195, %196, %cst_69 {dimension_numbers = #tpu.dot_dimension_numbers<[1], [0], [0], [1], [0, 0, 1, 1], [], []>} : vector<16x16xbf16>, vector<16x16xbf16>, vector<16x16xf32> -> vector<16x16xf32>
    %198 = vector.extract_strided_slice %177 {offsets = [0, 16], sizes = [16, 16], strides = [1, 1]} : vector<16x96xf32> to vector<16x16xf32>
    %199 = vector.extract_strided_slice %177 {offsets = [0, 48], sizes = [16, 16], strides = [1, 1]} : vector<16x96xf32> to vector<16x16xf32>
    %200 = vector.extract_strided_slice %177 {offsets = [0, 80], sizes = [16, 16], strides = [1, 1]} : vector<16x96xf32> to vector<16x16xf32>
    %201 = arith.truncf %198 : vector<16x16xf32> to vector<16x16xbf16>
    %202 = arith.truncf %199 : vector<16x16xf32> to vector<16x16xbf16>
    %cst_70 = arith.constant dense<0.000000e+00> : vector<16x16xf32>
    %203 = tpu.matmul %201, %202, %cst_70 {dimension_numbers = #tpu.dot_dimension_numbers<[1], [1], [0], [0], [0, 0, 1, 0], [], []>} : vector<16x16xbf16>, vector<16x16xbf16>, vector<16x16xf32> -> vector<16x16xf32>
    %204 = arith.addf %203, %1 : vector<16x16xf32>
    %cst_71 = arith.constant dense<0xFF800000> : vector<16xf32>
    %205 = vector.multi_reduction <maximumf>, %204, %cst_71 [1] : vector<16x16xf32> to vector<16xf32>
    %206 = vector.shape_cast %205 : vector<16xf32> to vector<16x1xf32>
    %207 = vector.broadcast %206 : vector<16x1xf32> to vector<16x16xf32>
    %208 = arith.subf %204, %207 : vector<16x16xf32>
    %209 = math.exp %208 : vector<16x16xf32>
    %cst_72 = arith.constant dense<0.000000e+00> : vector<16xf32>
    %210 = vector.multi_reduction <add>, %209, %cst_72 [1] : vector<16x16xf32> to vector<16xf32>
    %211 = vector.shape_cast %210 : vector<16xf32> to vector<16x1xf32>
    %212 = tpu.reciprocal %211 {approx = true} : vector<16x1xf32> -> vector<16x1xf32>
    %213 = vector.broadcast %212 : vector<16x1xf32> to vector<16x16xf32>
    %214 = arith.mulf %209, %213 : vector<16x16xf32>
    %215 = arith.truncf %214 : vector<16x16xf32> to vector<16x16xbf16>
    %216 = arith.truncf %200 : vector<16x16xf32> to vector<16x16xbf16>
    %cst_73 = arith.constant dense<0.000000e+00> : vector<16x16xf32>
    %217 = tpu.matmul %215, %216, %cst_73 {dimension_numbers = #tpu.dot_dimension_numbers<[1], [0], [0], [1], [0, 0, 1, 1], [], []>} : vector<16x16xbf16>, vector<16x16xbf16>, vector<16x16xf32> -> vector<16x16xf32>
    %218 = tpu.concatenate %197, %217 in 1 : vector<16x16xf32>, vector<16x16xf32> -> vector<16x32xf32>
    %219 = arith.truncf %218 : vector<16x32xf32> to vector<16x32xbf16>
    %c1_74 = arith.constant 1 : index
    %c0_75 = arith.constant 0 : index
    %c0_76 = arith.constant 0 : index
    %220 = vector.load %arg6[%c1_74, %c0_75, %c0_76] : memref<2x32x32xbf16, #tpu.memory_space<vmem>>, vector<1x32x32xbf16>
    %221 = vector.shape_cast %220 : vector<1x32x32xbf16> to vector<32x32xbf16>
    %cst_77 = arith.constant dense<0.000000e+00> : vector<16x32xf32>
    %222 = tpu.matmul %219, %221, %cst_77 {dimension_numbers = #tpu.dot_dimension_numbers<[1], [0], [0], [1], [0, 0, 1, 1], [], []>} : vector<16x32xbf16>, vector<32x32xbf16>, vector<16x32xf32> -> vector<16x32xf32>
    %223 = vector.broadcast %142 : vector<1x32xf32> to vector<16x32xf32>
    %224 = arith.addf %222, %223 : vector<16x32xf32>
    %225 = arith.addf %137, %224 : vector<16x32xf32>
    %cst_78 = arith.constant dense<0.000000e+00> : vector<16xf32>
    %226 = vector.multi_reduction <add>, %225, %cst_78 [1] : vector<16x32xf32> to vector<16xf32>
    %227 = vector.shape_cast %226 : vector<16xf32> to vector<16x1xf32>
    %cst_79 = arith.constant 3.200000e+01 : f32
    %228 = vector.broadcast %cst_79 : f32 to vector<16x1xf32>
    %229 = arith.divf %227, %228 : vector<16x1xf32>
    %230 = vector.broadcast %229 : vector<16x1xf32> to vector<16x32xf32>
    %231 = arith.subf %225, %230 : vector<16x32xf32>
    %232 = arith.mulf %231, %231 : vector<16x32xf32>
    %cst_80 = arith.constant dense<0.000000e+00> : vector<16xf32>
    %233 = vector.multi_reduction <add>, %232, %cst_80 [1] : vector<16x32xf32> to vector<16xf32>
    %234 = vector.shape_cast %233 : vector<16xf32> to vector<16x1xf32>
    %cst_81 = arith.constant 3.200000e+01 : f32
    %235 = vector.broadcast %cst_81 : f32 to vector<16x1xf32>
    %236 = arith.divf %234, %235 : vector<16x1xf32>
    %237 = vector.broadcast %229 : vector<16x1xf32> to vector<16x32xf32>
    %238 = arith.subf %225, %237 : vector<16x32xf32>
    %cst_82 = arith.constant 9.99999974E-6 : f32
    %239 = vector.broadcast %cst_82 : f32 to vector<16x1xf32>
    %240 = arith.addf %236, %239 : vector<16x1xf32>
    %241 = math.rsqrt %240 : vector<16x1xf32>
    %242 = vector.broadcast %241 : vector<16x1xf32> to vector<16x32xf32>
    %243 = arith.mulf %238, %242 : vector<16x32xf32>
    %244 = vector.broadcast %143 : vector<1x32xf32> to vector<16x32xf32>
    %245 = arith.mulf %243, %244 : vector<16x32xf32>
    %246 = vector.broadcast %144 : vector<1x32xf32> to vector<16x32xf32>
    %247 = arith.addf %245, %246 : vector<16x32xf32>
    %248 = arith.truncf %247 : vector<16x32xf32> to vector<16x32xbf16>
    %c1_83 = arith.constant 1 : index
    %c0_84 = arith.constant 0 : index
    %c0_85 = arith.constant 0 : index
    %249 = vector.load %arg7[%c1_83, %c0_84, %c0_85] : memref<2x32x128xbf16, #tpu.memory_space<vmem>>, vector<1x32x128xbf16>
    %250 = vector.shape_cast %249 : vector<1x32x128xbf16> to vector<32x128xbf16>
    %cst_86 = arith.constant dense<0.000000e+00> : vector<16x128xf32>
    %251 = tpu.matmul %248, %250, %cst_86 {dimension_numbers = #tpu.dot_dimension_numbers<[1], [0], [0], [1], [0, 0, 1, 1], [], []>} : vector<16x32xbf16>, vector<32x128xbf16>, vector<16x128xf32> -> vector<16x128xf32>
    %252 = vector.broadcast %149 : vector<1x128xf32> to vector<16x128xf32>
    %253 = arith.addf %251, %252 : vector<16x128xf32>
    %cst_87 = arith.constant 5.000000e-01 : f32
    %254 = vector.broadcast %cst_87 : f32 to vector<16x128xf32>
    %255 = arith.mulf %254, %253 : vector<16x128xf32>
    %cst_88 = arith.constant 4.471500e-02 : f32
    %256 = vector.broadcast %cst_88 : f32 to vector<16x128xf32>
    %257 = arith.mulf %256, %253 : vector<16x128xf32>
    %258 = arith.mulf %257, %253 : vector<16x128xf32>
    %259 = arith.mulf %258, %253 : vector<16x128xf32>
    %260 = arith.addf %253, %259 : vector<16x128xf32>
    %cst_89 = arith.constant 0.797884583 : f32
    %261 = vector.broadcast %cst_89 : f32 to vector<16x128xf32>
    %262 = arith.mulf %261, %260 : vector<16x128xf32>
    %263 = math.tanh %262 : vector<16x128xf32>
    %cst_90 = arith.constant 1.000000e+00 : f32
    %264 = vector.broadcast %cst_90 : f32 to vector<16x128xf32>
    %265 = arith.addf %264, %263 : vector<16x128xf32>
    %266 = arith.mulf %255, %265 : vector<16x128xf32>
    %267 = arith.truncf %266 : vector<16x128xf32> to vector<16x128xbf16>
    %c1_91 = arith.constant 1 : index
    %c0_92 = arith.constant 0 : index
    %c0_93 = arith.constant 0 : index
    %268 = vector.load %arg8[%c1_91, %c0_92, %c0_93] : memref<2x128x32xbf16, #tpu.memory_space<vmem>>, vector<1x128x32xbf16>
    %269 = vector.shape_cast %268 : vector<1x128x32xbf16> to vector<128x32xbf16>
    %cst_94 = arith.constant dense<0.000000e+00> : vector<16x32xf32>
    %270 = tpu.matmul %267, %269, %cst_94 {dimension_numbers = #tpu.dot_dimension_numbers<[1], [0], [0], [1], [0, 0, 1, 1], [], []>} : vector<16x128xbf16>, vector<128x32xbf16>, vector<16x32xf32> -> vector<16x32xf32>
    %271 = vector.broadcast %145 : vector<1x32xf32> to vector<16x32xf32>
    %272 = arith.addf %270, %271 : vector<16x32xf32>
    %273 = arith.addf %225, %272 : vector<16x32xf32>
    %274 = vector.extract_strided_slice %273 {offsets = [7, 0], sizes = [1, 32], strides = [1, 1]} : vector<16x32xf32> to vector<1x32xf32>
    %275 = vector.extract_strided_slice %273 {offsets = [15, 0], sizes = [1, 32], strides = [1, 1]} : vector<16x32xf32> to vector<1x32xf32>
    %276 = tpu.concatenate %274, %275 in 0 : vector<1x32xf32>, vector<1x32xf32> -> vector<2x32xf32>
    %c0_95 = arith.constant 0 : index
    %c0_96 = arith.constant 0 : index
    %277 = vector.load %arg9[%c0_95, %c0_96] : memref<2x32xf32, #tpu.memory_space<vmem>>, vector<2x32xf32>
    %278 = vector.extract_strided_slice %277 {offsets = [0, 0], sizes = [1, 32], strides = [1, 1]} : vector<2x32xf32> to vector<1x32xf32>
    %279 = vector.extract_strided_slice %277 {offsets = [1, 0], sizes = [1, 32], strides = [1, 1]} : vector<2x32xf32> to vector<1x32xf32>
    %cst_97 = arith.constant dense<0.000000e+00> : vector<2xf32>
    %280 = vector.multi_reduction <add>, %276, %cst_97 [1] : vector<2x32xf32> to vector<2xf32>
    %281 = vector.shape_cast %280 : vector<2xf32> to vector<2x1xf32>
    %cst_98 = arith.constant 3.200000e+01 : f32
    %282 = vector.broadcast %cst_98 : f32 to vector<2x1xf32>
    %283 = arith.divf %281, %282 : vector<2x1xf32>
    %284 = vector.broadcast %283 : vector<2x1xf32> to vector<2x32xf32>
    %285 = arith.subf %276, %284 : vector<2x32xf32>
    %286 = arith.mulf %285, %285 : vector<2x32xf32>
    %cst_99 = arith.constant dense<0.000000e+00> : vector<2xf32>
    %287 = vector.multi_reduction <add>, %286, %cst_99 [1] : vector<2x32xf32> to vector<2xf32>
    %288 = vector.shape_cast %287 : vector<2xf32> to vector<2x1xf32>
    %cst_100 = arith.constant 3.200000e+01 : f32
    %289 = vector.broadcast %cst_100 : f32 to vector<2x1xf32>
    %290 = arith.divf %288, %289 : vector<2x1xf32>
    %291 = vector.broadcast %283 : vector<2x1xf32> to vector<2x32xf32>
    %292 = arith.subf %276, %291 : vector<2x32xf32>
    %cst_101 = arith.constant 9.99999974E-6 : f32
    %293 = vector.broadcast %cst_101 : f32 to vector<2x1xf32>
    %294 = arith.addf %290, %293 : vector<2x1xf32>
    %295 = math.rsqrt %294 : vector<2x1xf32>
    %296 = vector.broadcast %295 : vector<2x1xf32> to vector<2x32xf32>
    %297 = arith.mulf %292, %296 : vector<2x32xf32>
    %298 = vector.broadcast %278 : vector<1x32xf32> to vector<2x32xf32>
    %299 = arith.mulf %297, %298 : vector<2x32xf32>
    %300 = vector.broadcast %279 : vector<1x32xf32> to vector<2x32xf32>
    %301 = arith.addf %299, %300 : vector<2x32xf32>
    %302 = arith.truncf %301 : vector<2x32xf32> to vector<2x32xbf16>
    %c0_102 = arith.constant 0 : index
    %c0_103 = arith.constant 0 : index
    %303 = vector.load %arg10[%c0_102, %c0_103] : memref<32x128xbf16, #tpu.memory_space<vmem>>, vector<32x128xbf16>
    %cst_104 = arith.constant dense<0.000000e+00> : vector<2x128xf32>
    %304 = tpu.matmul %302, %303, %cst_104 {dimension_numbers = #tpu.dot_dimension_numbers<[1], [0], [0], [1], [0, 0, 1, 1], [], []>} : vector<2x32xbf16>, vector<32x128xbf16>, vector<2x128xf32> -> vector<2x128xf32>
    %c0_105 = arith.constant 0 : index
    %c0_106 = arith.constant 0 : index
    %305 = vector.load %arg11[%c0_105, %c0_106] : memref<2x128xf32, #tpu.memory_space<vmem>>, vector<2x128xf32>
    tpu.vector_store %arg11[%c0_105, %c0_106], %304 {strides = array<i32>} : memref<2x128xf32, #tpu.memory_space<vmem>>, vector<2x128xf32>,
    return
  }
}

</mosaic_0001>

<llo_original>
// kernel: gpt_forward.1
$region0: #{gpt_forward.1}
  #allocation0 [shape = 'u32[]', space=smem, size = 0x4, offset = 0x4, fixed_abs, tag = 'smem constant byte address 0x4 - core index']
  #allocation1 [shape = 'u32[72,128]{1,0:T(1,128)}', space=vmem, size = 0x9000, scoped, tag = 'internal scratch']
  %s0 = inlined_call_operand.vmem [shape: f32[16,32], index: 0, kind: input, shape index: {}]
  %s1 = inlined_call_operand.vmem [shape: f32[16,16], index: 1, kind: input, shape index: {}]
  %s2 = inlined_call_operand.vmem [shape: f32[2,6,32], index: 2, kind: input, shape index: {}]
  %s3 = inlined_call_operand.vmem [shape: f32[2,1,96], index: 3, kind: input, shape index: {}]
  %s4 = inlined_call_operand.vmem [shape: f32[2,1,128], index: 4, kind: input, shape index: {}]
  %s5 = inlined_call_operand.vmem [shape: bf16[2,32,96], index: 5, kind: input, shape index: {}]
  %s6 = inlined_call_operand.vmem [shape: bf16[2,32,32], index: 6, kind: input, shape index: {}]
  %s7 = inlined_call_operand.vmem [shape: bf16[2,32,128], index: 7, kind: input, shape index: {}]
  %s8 = inlined_call_operand.vmem [shape: bf16[2,128,32], index: 8, kind: input, shape index: {}]
  %s9 = inlined_call_operand.vmem [shape: f32[2,32], index: 9, kind: input, shape index: {}]
  %s10 = inlined_call_operand.vmem [shape: bf16[32,128], index: 10, kind: input, shape index: {}]
  %s11 = inlined_call_operand.hbm [shape: f32[2,128], index: 11, kind: output, shape index: {}]
  %s12 = sld [smem:[#allocation0]]
  $region54: #{gpt_forward.1} parent=0
    _
  %s14 = ssub.s32 1, %s12
  %s15 = scalar_select 0, %s14, %s12
  $region1: #{gpt_forward.1} parent=0
    #allocation2 [shape = 'u8[1024]{0}', space=vmem, size = 0x400, scoped, tag = 'output window, operand 0, single buffered']
    #allocation3 [shape = 's32[1]{0}', space=sflag, size = 0x4, scoped, tag = 'scoped memory for gpt_forward.1']
    %16 = vsyncpa [#allocation3], 0
    // Predicated region
    $region2: #{gpt_forward.1} parent=1 // pred_check
      _
    $region3: #{gpt_forward.1} parent=1 // pred_check_branch
      %18 = sbr.rel (0) target = $region5
    $region4: #{gpt_forward.1} parent=1 // pred_region
      _
    $region5: #{gpt_forward.1} parent=1 // pred_fallthru
      _
    // Predicated region
    $region6: #{gpt_forward.1} parent=1 // pred_check
      _
    $region7: #{gpt_forward.1} parent=1 // pred_check_branch
      %20 = sbr.rel (0) target = $region9
    $region8: #{gpt_forward.1} parent=1 // pred_region
      _
    $region9: #{gpt_forward.1} parent=1 // pred_fallthru
      _
    // Predicated region
    $region10: #{gpt_forward.1} parent=1 // pred_check
      _
    $region11: #{gpt_forward.1} parent=1 // pred_check_branch
      %22 = sbr.rel (0) target = $region13
    $region12: #{gpt_forward.1} parent=1 // pred_region
      _
    $region13: #{gpt_forward.1} parent=1 // pred_fallthru
      _
    // Predicated region
    $region14: #{gpt_forward.1} parent=1 // pred_check
      _
    $region15: #{gpt_forward.1} parent=1 // pred_check_branch
      %24 = sbr.rel (0) target = $region17
    $region16: #{gpt_forward.1} parent=1 // pred_region
      _
    $region17: #{gpt_forward.1} parent=1 // pred_fallthru
      _
    // Predicated region
    $region18: #{gpt_forward.1} parent=1 // pred_check
      _
    $region19: #{gpt_forward.1} parent=1 // pred_check_branch
      %26 = sbr.rel (0) target = $region21
    $region20: #{gpt_forward.1} parent=1 // pred_region
      _
    $region21: #{gpt_forward.1} parent=1 // pred_fallthru
      _
    // Predicated region
    $region22: #{gpt_forward.1} parent=1 // pred_check
      _
    $region23: #{gpt_forward.1} parent=1 // pred_check_branch
      %28 = sbr.rel (0) target = $region25
    $region24: #{gpt_forward.1} parent=1 // pred_region
      _
    $region25: #{gpt_forward.1} parent=1 // pred_fallthru
      _
    // Predicated region
    $region26: #{gpt_forward.1} parent=1 // pred_check
      _
    $region27: #{gpt_forward.1} parent=1 // pred_check_branch
      %30 = sbr.rel (0) target = $region29
    $region28: #{gpt_forward.1} parent=1 // pred_region
      _
    $region29: #{gpt_forward.1} parent=1 // pred_fallthru
      _
    // Predicated region
    $region30: #{gpt_forward.1} parent=1 // pred_check
      _
    $region31: #{gpt_forward.1} parent=1 // pred_check_branch
      %32 = sbr.rel (0) target = $region33
    $region32: #{gpt_forward.1} parent=1 // pred_region
      _
    $region33: #{gpt_forward.1} parent=1 // pred_fallthru
      _
    // Predicated region
    $region34: #{gpt_forward.1} parent=1 // pred_check
      _
    $region35: #{gpt_forward.1} parent=1 // pred_check_branch
      %34 = sbr.rel (0) target = $region37
    $region36: #{gpt_forward.1} parent=1 // pred_region
      _
    $region37: #{gpt_forward.1} parent=1 // pred_fallthru
      _
    // Predicated region
    $region38: #{gpt_forward.1} parent=1 // pred_check
      _
    $region39: #{gpt_forward.1} parent=1 // pred_check_branch
      %36 = sbr.rel (0) target = $region41
    $region40: #{gpt_forward.1} parent=1 // pred_region
      _
    $region41: #{gpt_forward.1} parent=1 // pred_fallthru
      _
    // Predicated region
    $region42: #{gpt_forward.1} parent=1 // pred_check
      _
    $region43: #{gpt_forward.1} parent=1 // pred_check_branch
      %38 = sbr.rel (0) target = $region45
    $region44: #{gpt_forward.1} parent=1 // pred_region
      _
    $region45: #{gpt_forward.1} parent=1 // pred_fallthru
      _
    %v40 = vld [vmem:[%s0] sm:$0xff]
    %v41 = vld [vmem:[%s0 + $0x8] sm:$0xff]
    %v42 = vld [vmem:[%s1] sm:$0xff]
    %v43 = vld [vmem:[%s1 + $0x8] sm:$0xff]
    %v44 = vld [vmem:[%s2] sm:$0x3f]
    %v45 = vld [vmem:[%s3] sm:$0x1]
    %v46 = vld [vmem:[%s4] sm:$0x1]
    %vm47 = vcmask 261120
    %v48 = vsel %vm47, %v40, 0.0
    %49 = vadd.xlane.f32.xlu0 %v48
    %v50 = vpop.xlane.xlu0 %49
    %v51 = vsel %vm47, %v41, 0.0
    %52 = vadd.xlane.f32.xlu0 %v51
    %v53 = vpop.xlane.xlu0 %52
    %v54 = vrcp.pop 32.0
    %v55 = vmul.f32 32.0, %v54
    %v56 = vsub.f32 1.0, %v55
    %v57 = vmul.f32 %v54, %v56
    %v58 = vadd.f32 %v54, %v57
    %vm59 = vweird.f32 %v54
    %v60 = vsel %vm59, %v54, %v58
    %v61 = vmul.f32 %v50, %v60
    %v62 = vmul.f32 %v53, %v60
    %v63 = vsub.f32 %v40, %v61
    %v64 = vsub.f32 %v41, %v62
    %v65 = vmul.f32 %v63, %v63
    %v66 = vmul.f32 %v64, %v64
    %v67 = vsel %vm47, %v65, 0.0
    %68 = vadd.xlane.f32.xlu0 %v67
    %v69 = vpop.xlane.xlu0 %68
    %v70 = vsel %vm47, %v66, 0.0
    %71 = vadd.xlane.f32.xlu0 %v70
    %v72 = vpop.xlane.xlu0 %71
    %v73 = vmul.f32 %v69, %v60
    %v74 = vmul.f32 %v72, %v60
    %v75 = vadd.f32 %v73, 1e-05
    %v76 = vadd.f32 %v74, 1e-05
    %v77 = vrsqrt.pop %v75
    %v78 = vmul.f32 %v77, %v75
    %v79 = vmul.f32 %v78, %v77
    %v80 = vmul.f32 0.5, %v79
    %v81 = vsub.f32 1.5, %v80
    %v82 = vmul.f32 %v77, %v81
    %vm83 = vweird.f32 %v75
    %vm84 = vweird.f32 %v77
    %vm85 = vmor %vm83, %vm84
    %v86 = vsel %vm85, %v77, %v82
    %v87 = vrsqrt.pop %v76
    %v88 = vmul.f32 %v87, %v76
    %v89 = vmul.f32 %v88, %v87
    %v90 = vmul.f32 0.5, %v89
    %v91 = vsub.f32 1.5, %v90
    %v92 = vmul.f32 %v87, %v91
    %vm93 = vweird.f32 %v76
    %vm94 = vweird.f32 %v87
    %vm95 = vmor %vm93, %vm94
    %v96 = vsel %vm95, %v87, %v92
    %v97 = vmul.f32 %v63, %v86
    %v98 = vmul.f32 %v64, %v96
    %v99 = vperm.slane %v44, 0
    %v100 = vmul.f32 %v97, %v99
    %v101 = vmul.f32 %v98, %v99
    %v102 = vperm.slane %v44, 1
    %v103 = vadd.f32 %v100, %v102
    %v104 = vadd.f32 %v101, %v102
    %v105 = vpack.c.bf16 %v104, %v103
    %v106 = vld [vmem:[%s5] sm:$0xf]
    %v107 = vld [vmem:[%s5 + $0x4] sm:$0xf]
    %v108 = vld [vmem:[%s5 + $0x8] sm:$0xf]
    %v109 = vld [vmem:[%s5 + $0xc] sm:$0xf]
    %v111 = vperm.slane %v45, 0
    %v117 = vunpack.c.l.b16 %v106
    %v118 = vunpack.c.l.b16 %v107
    %v119 = vunpack.c.l.b16 %v108
    %v120 = vunpack.c.l.b16 %v109
    %v121 = vpack.c.b16 %v118, %v117
    %v122 = vpack.c.b16 %v120, %v119
    %v126 = vsel %vm47, %v105, 0
    %128 = vmatpush.bf16.msra.mxu0 0
    %129 = vmatpush.bf16.msra.mxu0 0
    %130 = vmatpush.bf16.msra.mxu0 0
    %131 = vmatpush.bf16.msra.mxu0 0
    %132 = vmatpush.bf16.msra.mxu0 0
    %133 = vmatpush.bf16.msra.mxu0 0
    %134 = vmatpush.bf16.msra.mxu0 %v122
    %135 = vmatpush.bf16.msra.mxu0 %v121
    %136 = vmatmul.bf16.gmra.mxu0 %v126
    %v137 = vpop.f32.mrf.mxu0
    %v138 = vadd.f32 %v111, %v137
    %v139 = vpop.f32.mrf.mxu0
    %v140 = vadd.f32 %v111, %v139
    %141 = vdwg.mxu0
    %v142 = vpack.c.bf16 %v140, %v138
    %144 = vrot.lane.b32.xlu0 %v142, 96
    %v145 = vpop.permute.xlu0 %144
    %vm146 = vcmask 130048
    %v148 = vsel %vm146, %v142, 0
    %v151 = vsel %vm146, %v145, 0
    %153 = vmatpush.bf16.xpose.msra.mxu0 0
    %154 = vmatpush.bf16.xpose.msra.mxu0 0
    %155 = vmatpush.bf16.xpose.msra.mxu0 0
    %156 = vmatpush.bf16.xpose.msra.mxu0 0
    %157 = vmatpush.bf16.xpose.msra.mxu0 0
    %158 = vmatpush.bf16.xpose.msra.mxu0 0
    %159 = vmatpush.bf16.xpose.msra.mxu0 0
    %160 = vmatpush.bf16.xpose.msra.mxu0 %v151
    %161 = vmatmul.bf16.gmra.mxu0 %v148
    %v162 = vpop.f32.mrf.mxu0
    %v163 = vadd.f32 %v42, %v162
    %v164 = vpop.f32.mrf.mxu0
    %v165 = vadd.f32 %v43, %v164
    %166 = vdwg.mxu0
    %v167 = vsel %vm146, %v163, -inf
    %168 = vmax.xlane.f32.xlu0 %v167
    %v169 = vpop.xlane.xlu0 %168
    %v170 = vsel %vm146, %v165, -inf
    %171 = vmax.xlane.f32.xlu0 %v170
    %v172 = vpop.xlane.xlu0 %171
    %v173 = vsub.f32 %v163, %v169
    %v174 = vsub.f32 %v165, %v172
    %v175 = vmul.f32 %v173, 1.442695
    %v176 = vpow.pop %v175
    %v177 = vmul.f32 %v174, 1.442695
    %v178 = vpow.pop %v177
    %v179 = vsel %vm146, %v176, 0.0
    %180 = vadd.xlane.f32.xlu0 %v179
    %v181 = vpop.xlane.xlu0 %180
    %v182 = vsel %vm146, %v178, 0.0
    %183 = vadd.xlane.f32.xlu0 %v182
    %v184 = vpop.xlane.xlu0 %183
    %v185 = vrcp.pop %v181
    %v186 = vrcp.pop %v184
    %v187 = vmul.f32 %v176, %v185
    %v188 = vmul.f32 %v178, %v186
    %v189 = vpack.c.bf16 %v188, %v187
    %190 = vrot.lane.b32.xlu0 %v142, 64
    %v191 = vpop.permute.xlu0 %190
    %v194 = vsel %vm146, %v189, 0
    %196 = vmatpush.bf16.msra.mxu0 0
    %197 = vmatpush.bf16.msra.mxu0 0
    %198 = vmatpush.bf16.msra.mxu0 0
    %199 = vmatpush.bf16.msra.mxu0 0
    %200 = vmatpush.bf16.msra.mxu0 0
    %201 = vmatpush.bf16.msra.mxu0 0
    %202 = vmatpush.bf16.msra.mxu0 0
    %203 = vmatpush.bf16.msra.mxu0 %v191
    %204 = vmatmul.bf16.gmra.mxu0 %v194
    %v205 = vpop.f32.mrf.mxu0
    %v206 = vadd.f32 0.0, %v205
    %v207 = vpop.f32.mrf.mxu0
    %v208 = vadd.f32 0.0, %v207
    %209 = vdwg.mxu0
    %210 = vrot.lane.b32.xlu0 %v142, 112
    %v211 = vpop.permute.xlu0 %210
    %212 = vrot.lane.b32.xlu0 %v142, 80
    %v213 = vpop.permute.xlu0 %212
    %v215 = vsel %vm146, %v211, 0
    %v218 = vsel %vm146, %v213, 0
    %220 = vmatpush.bf16.xpose.msra.mxu0 0
    %221 = vmatpush.bf16.xpose.msra.mxu0 0
    %222 = vmatpush.bf16.xpose.msra.mxu0 0
    %223 = vmatpush.bf16.xpose.msra.mxu0 0
    %224 = vmatpush.bf16.xpose.msra.mxu0 0
    %225 = vmatpush.bf16.xpose.msra.mxu0 0
    %226 = vmatpush.bf16.xpose.msra.mxu0 0
    %227 = vmatpush.bf16.xpose.msra.mxu0 %v218
    %228 = vmatmul.bf16.gmra.mxu0 %v215
    %v229 = vpop.f32.mrf.mxu0
    %v230 = vadd.f32 %v42, %v229
    %v231 = vpop.f32.mrf.mxu0
    %v232 = vadd.f32 %v43, %v231
    %233 = vdwg.mxu0
    %v234 = vsel %vm146, %v230, -inf
    %235 = vmax.xlane.f32.xlu0 %v234
    %v236 = vpop.xlane.xlu0 %235
    %v237 = vsel %vm146, %v232, -inf
    %238 = vmax.xlane.f32.xlu0 %v237
    %v239 = vpop.xlane.xlu0 %238
    %v240 = vsub.f32 %v230, %v236
    %v241 = vsub.f32 %v232, %v239
    %v242 = vmul.f32 %v240, 1.442695
    %v243 = vpow.pop %v242
    %v244 = vmul.f32 %v241, 1.442695
    %v245 = vpow.pop %v244
    %v246 = vsel %vm146, %v243, 0.0
    %247 = vadd.xlane.f32.xlu0 %v246
    %v248 = vpop.xlane.xlu0 %247
    %v249 = vsel %vm146, %v245, 0.0
    %250 = vadd.xlane.f32.xlu0 %v249
    %v251 = vpop.xlane.xlu0 %250
    %v252 = vrcp.pop %v248
    %v253 = vrcp.pop %v251
    %v254 = vmul.f32 %v243, %v252
    %v255 = vmul.f32 %v245, %v253
    %v256 = vpack.c.bf16 %v255, %v254
    %257 = vrot.lane.b32.xlu0 %v142, 48
    %v258 = vpop.permute.xlu0 %257
    %v261 = vsel %vm146, %v256, 0
    %263 = vmatpush.bf16.msra.mxu0 0
    %264 = vmatpush.bf16.msra.mxu0 0
    %265 = vmatpush.bf16.msra.mxu0 0
    %266 = vmatpush.bf16.msra.mxu0 0
    %267 = vmatpush.bf16.msra.mxu0 0
    %268 = vmatpush.bf16.msra.mxu0 0
    %269 = vmatpush.bf16.msra.mxu0 0
    %270 = vmatpush.bf16.msra.mxu0 %v258
    %271 = vmatmul.bf16.gmra.mxu0 %v261
    %v272 = vpop.f32.mrf.mxu0
    %v273 = vadd.f32 0.0, %v272
    %v274 = vpop.f32.mrf.mxu0
    %v275 = vadd.f32 0.0, %v274
    %276 = vdwg.mxu0
    %279 = vrot.lane.b32.xlu0 %v273, 16
    %v280 = vpop.permute.xlu0 %279
    %281 = vrot.lane.b32.xlu0 %v275, 16
    %v282 = vpop.permute.xlu0 %281
    %v285 = vsel %vm146, %v206, %v280
    %v286 = vsel %vm146, %v208, %v282
    %v287 = vpack.c.bf16 %v286, %v285
    %v288 = vld [vmem:[%s6] sm:$0xf]
    %v289 = vld [vmem:[%s6 + $0x4] sm:$0xf]
    %v290 = vld [vmem:[%s6 + $0x8] sm:$0xf]
    %v291 = vld [vmem:[%s6 + $0xc] sm:$0xf]
    %v292 = vperm.slane %v44, 2
    %v297 = vunpack.c.l.b16 %v288
    %v298 = vunpack.c.l.b16 %v289
    %v299 = vunpack.c.l.b16 %v290
    %v300 = vunpack.c.l.b16 %v291
    %v301 = vpack.c.b16 %v298, %v297
    %v302 = vpack.c.b16 %v300, %v299
    %v306 = vsel %vm47, %v287, 0
    %308 = vmatpush.bf16.msra.mxu0 0
    %309 = vmatpush.bf16.msra.mxu0 0
    %310 = vmatpush.bf16.msra.mxu0 0
    %311 = vmatpush.bf16.msra.mxu0 0
    %312 = vmatpush.bf16.msra.mxu0 0
    %313 = vmatpush.bf16.msra.mxu0 0
    %314 = vmatpush.bf16.msra.mxu0 %v302
    %315 = vmatpush.bf16.msra.mxu0 %v301
    %316 = vmatmul.bf16.gmra.mxu0 %v306
    %v317 = vpop.f32.mrf.mxu0
    %v318 = vadd.f32 %v292, %v317
    %v319 = vpop.f32.mrf.mxu0
    %v320 = vadd.f32 %v292, %v319
    %321 = vdwg.mxu0
    %v322 = vadd.f32 %v40, %v318
    %v323 = vadd.f32 %v41, %v320
    %v324 = vsel %vm47, %v322, 0.0
    %325 = vadd.xlane.f32.xlu0 %v324
    %v326 = vpop.xlane.xlu0 %325
    %v327 = vsel %vm47, %v323, 0.0
    %328 = vadd.xlane.f32.xlu0 %v327
    %v329 = vpop.xlane.xlu0 %328
    %v330 = vmul.f32 %v326, %v60
    %v331 = vmul.f32 %v329, %v60
    %v332 = vsub.f32 %v322, %v330
    %v333 = vsub.f32 %v323, %v331
    %v334 = vmul.f32 %v332, %v332
    %v335 = vmul.f32 %v333, %v333
    %v336 = vsel %vm47, %v334, 0.0
    %337 = vadd.xlane.f32.xlu0 %v336
    %v338 = vpop.xlane.xlu0 %337
    %v339 = vsel %vm47, %v335, 0.0
    %340 = vadd.xlane.f32.xlu0 %v339
    %v341 = vpop.xlane.xlu0 %340
    %v342 = vmul.f32 %v338, %v60
    %v343 = vmul.f32 %v341, %v60
    %v344 = vadd.f32 %v342, 1e-05
    %v345 = vadd.f32 %v343, 1e-05
    %v346 = vrsqrt.pop %v344
    %v347 = vmul.f32 %v346, %v344
    %v348 = vmul.f32 %v347, %v346
    %v349 = vmul.f32 0.5, %v348
    %v350 = vsub.f32 1.5, %v349
    %v351 = vmul.f32 %v346, %v350
    %vm352 = vweird.f32 %v344
    %vm353 = vweird.f32 %v346
    %vm354 = vmor %vm352, %vm353
    %v355 = vsel %vm354, %v346, %v351
    %v356 = vrsqrt.pop %v345
    %v357 = vmul.f32 %v356, %v345
    %v358 = vmul.f32 %v357, %v356
    %v359 = vmul.f32 0.5, %v358
    %v360 = vsub.f32 1.5, %v359
    %v361 = vmul.f32 %v356, %v360
    %vm362 = vweird.f32 %v345
    %vm363 = vweird.f32 %v356
    %vm364 = vmor %vm362, %vm363
    %v365 = vsel %vm364, %v356, %v361
    %v366 = vmul.f32 %v332, %v355
    %v367 = vmul.f32 %v333, %v365
    %v368 = vperm.slane %v44, 3
    %v369 = vmul.f32 %v366, %v368
    %v370 = vmul.f32 %v367, %v368
    %v371 = vperm.slane %v44, 4
    %v372 = vadd.f32 %v369, %v371
    %v373 = vadd.f32 %v370, %v371
    %v374 = vpack.c.bf16 %v373, %v372
    %v375 = vld [vmem:[%s7] sm:$0xf]
    %v376 = vld [vmem:[%s7 + $0x4] sm:$0xf]
    %v377 = vld [vmem:[%s7 + $0x8] sm:$0xf]
    %v378 = vld [vmem:[%s7 + $0xc] sm:$0xf]
    %v380 = vperm.slane %v46, 0
    %v386 = vunpack.c.l.b16 %v375
    %v387 = vunpack.c.l.b16 %v376
    %v388 = vunpack.c.l.b16 %v377
    %v389 = vunpack.c.l.b16 %v378
    %v390 = vpack.c.b16 %v387, %v386
    %v391 = vpack.c.b16 %v389, %v388
    %v395 = vsel %vm47, %v374, 0
    %397 = vmatpush.bf16.msra.mxu0 0
    %398 = vmatpush.bf16.msra.mxu0 0
    %399 = vmatpush.bf16.msra.mxu0 0
    %400 = vmatpush.bf16.msra.mxu0 0
    %401 = vmatpush.bf16.msra.mxu0 0
    %402 = vmatpush.bf16.msra.mxu0 0
    %403 = vmatpush.bf16.msra.mxu0 %v391
    %404 = vmatpush.bf16.msra.mxu0 %v390
    %405 = vmatmul.bf16.gmra.mxu0 %v395
    %v406 = vpop.f32.mrf.mxu0
    %v407 = vadd.f32 %v380, %v406
    %v408 = vpop.f32.mrf.mxu0
    %v409 = vadd.f32 %v380, %v408
    %410 = vdwg.mxu0
    %v411 = vmul.f32 %v407, 0.5
    %v412 = vmul.f32 %v409, 0.5
    %v413 = vmul.f32 %v407, 0.044715
    %v414 = vmul.f32 %v409, 0.044715
    %v415 = vmul.f32 %v413, %v407
    %v416 = vmul.f32 %v414, %v409
    %v417 = vmul.f32 %v415, %v407
    %v418 = vmul.f32 %v416, %v409
    %v419 = vadd.f32 %v407, %v417
    %v420 = vadd.f32 %v409, %v418
    %v421 = vmul.f32 %v419, 0.7978846
    %v422 = vmul.f32 %v420, 0.7978846
    %v423 = vtanh.pop %v421
    %v424 = vtanh.pop %v422
    %v425 = vadd.f32 %v423, 1.0
    %v426 = vadd.f32 %v424, 1.0
    %v427 = vmul.f32 %v411, %v425
    %v428 = vmul.f32 %v412, %v426
    %v429 = vpack.c.bf16 %v428, %v427
    %v430 = vld [vmem:[%s8] sm:$0xf]
    %v431 = vld [vmem:[%s8 + $0x4] sm:$0xf]
    %v432 = vld [vmem:[%s8 + $0x8] sm:$0xf]
    %v433 = vld [vmem:[%s8 + $0xc] sm:$0xf]
    %v434 = vld [vmem:[%s8 + $0x10] sm:$0xf]
    %v435 = vld [vmem:[%s8 + $0x14] sm:$0xf]
    %v436 = vld [vmem:[%s8 + $0x18] sm:$0xf]
    %v437 = vld [vmem:[%s8 + $0x1c] sm:$0xf]
    %v438 = vld [vmem:[%s8 + $0x20] sm:$0xf]
    %v439 = vld [vmem:[%s8 + $0x24] sm:$0xf]
    %v440 = vld [vmem:[%s8 + $0x28] sm:$0xf]
    %v441 = vld [vmem:[%s8 + $0x2c] sm:$0xf]
    %v442 = vld [vmem:[%s8 + $0x30] sm:$0xf]
    %v443 = vld [vmem:[%s8 + $0x34] sm:$0xf]
    %v444 = vld [vmem:[%s8 + $0x38] sm:$0xf]
    %v445 = vld [vmem:[%s8 + $0x3c] sm:$0xf]
    %v446 = vperm.slane %v44, 5
    %v463 = vunpack.c.l.b16 %v430
    %v464 = vunpack.c.l.b16 %v431
    %v465 = vunpack.c.l.b16 %v432
    %v466 = vunpack.c.l.b16 %v433
    %v467 = vunpack.c.l.b16 %v434
    %v468 = vunpack.c.l.b16 %v435
    %v469 = vunpack.c.l.b16 %v436
    %v470 = vunpack.c.l.b16 %v437
    %v471 = vunpack.c.l.b16 %v438
    %v472 = vunpack.c.l.b16 %v439
    %v473 = vunpack.c.l.b16 %v440
    %v474 = vunpack.c.l.b16 %v441
    %v475 = vunpack.c.l.b16 %v442
    %v476 = vunpack.c.l.b16 %v443
    %v477 = vunpack.c.l.b16 %v444
    %v478 = vunpack.c.l.b16 %v445
    %v479 = vpack.c.b16 %v464, %v463
    %v480 = vpack.c.b16 %v466, %v465
    %v481 = vpack.c.b16 %v468, %v467
    %v482 = vpack.c.b16 %v470, %v469
    %v483 = vpack.c.b16 %v472, %v471
    %v484 = vpack.c.b16 %v474, %v473
    %v485 = vpack.c.b16 %v476, %v475
    %v486 = vpack.c.b16 %v478, %v477
    %495 = vmatpush.bf16.msra.mxu0 %v486
    %496 = vmatpush.bf16.msra.mxu0 %v485
    %497 = vmatpush.bf16.msra.mxu0 %v484
    %498 = vmatpush.bf16.msra.mxu0 %v483
    %499 = vmatpush.bf16.msra.mxu0 %v482
    %500 = vmatpush.bf16.msra.mxu0 %v481
    %501 = vmatpush.bf16.msra.mxu0 %v480
    %502 = vmatpush.bf16.msra.mxu0 %v479
    %503 = vmatmul.bf16.gmra.mxu0 %v429
    %v504 = vpop.f32.mrf.mxu0
    %v505 = vadd.f32 %v446, %v504
    %v506 = vpop.f32.mrf.mxu0
    %v507 = vadd.f32 %v446, %v506
    %508 = vdwg.mxu0
    %v509 = vadd.f32 %v322, %v505
    %v510 = vadd.f32 %v323, %v507
    %s511 = scalar_lea.vmem %s2, 8
    %v512 = vld [vmem:[%s511] sm:$0x3f]
    %s513 = scalar_lea.vmem %s3, 1
    %v514 = vld [vmem:[%s513] sm:$0x1]
    %s515 = scalar_lea.vmem %s4, 1
    %v516 = vld [vmem:[%s515] sm:$0x1]
    %v517 = vsel %vm47, %v509, 0.0
    %518 = vadd.xlane.f32.xlu0 %v517
    %v519 = vpop.xlane.xlu0 %518
    %v520 = vsel %vm47, %v510, 0.0
    %521 = vadd.xlane.f32.xlu0 %v520
    %v522 = vpop.xlane.xlu0 %521
    %v523 = vmul.f32 %v519, %v60
    %v524 = vmul.f32 %v522, %v60
    %v525 = vsub.f32 %v509, %v523
    %v526 = vsub.f32 %v510, %v524
    %v527 = vmul.f32 %v525, %v525
    %v528 = vmul.f32 %v526, %v526
    %v529 = vsel %vm47, %v527, 0.0
    %530 = vadd.xlane.f32.xlu0 %v529
    %v531 = vpop.xlane.xlu0 %530
    %v532 = vsel %vm47, %v528, 0.0
    %533 = vadd.xlane.f32.xlu0 %v532
    %v534 = vpop.xlane.xlu0 %533
    %v535 = vmul.f32 %v531, %v60
    %v536 = vmul.f32 %v534, %v60
    %v537 = vadd.f32 %v535, 1e-05
    %v538 = vadd.f32 %v536, 1e-05
    %v539 = vrsqrt.pop %v537
    %v540 = vmul.f32 %v539, %v537
    %v541 = vmul.f32 %v540, %v539
    %v542 = vmul.f32 0.5, %v541
    %v543 = vsub.f32 1.5, %v542
    %v544 = vmul.f32 %v539, %v543
    %vm545 = vweird.f32 %v537
    %vm546 = vweird.f32 %v539
    %vm547 = vmor %vm545, %vm546
    %v548 = vsel %vm547, %v539, %v544
    %v549 = vrsqrt.pop %v538
    %v550 = vmul.f32 %v549, %v538
    %v551 = vmul.f32 %v550, %v549
    %v552 = vmul.f32 0.5, %v551
    %v553 = vsub.f32 1.5, %v552
    %v554 = vmul.f32 %v549, %v553
    %vm555 = vweird.f32 %v538
    %vm556 = vweird.f32 %v549
    %vm557 = vmor %vm555, %vm556
    %v558 = vsel %vm557, %v549, %v554
    %v559 = vmul.f32 %v525, %v548
    %v560 = vmul.f32 %v526, %v558
    %v561 = vperm.slane %v512, 0
    %v562 = vmul.f32 %v559, %v561
    %v563 = vmul.f32 %v560, %v561
    %v564 = vperm.slane %v512, 1
    %v565 = vadd.f32 %v562, %v564
    %v566 = vadd.f32 %v563, %v564
    %v567 = vpack.c.bf16 %v566, %v565
    %s568 = scalar_lea.vmem %s5, 16
    %v569 = vld [vmem:[%s568] sm:$0xf]
    %v570 = vld [vmem:[%s568 + $0x4] sm:$0xf]
    %v571 = vld [vmem:[%s568 + $0x8] sm:$0xf]
    %v572 = vld [vmem:[%s568 + $0xc] sm:$0xf]
    %v574 = vperm.slane %v514, 0
    %v580 = vunpack.c.l.b16 %v569
    %v581 = vunpack.c.l.b16 %v570
    %v582 = vunpack.c.l.b16 %v571
    %v583 = vunpack.c.l.b16 %v572
    %v584 = vpack.c.b16 %v581, %v580
    %v585 = vpack.c.b16 %v583, %v582
    %v589 = vsel %vm47, %v567, 0
    %591 = vmatpush.bf16.msra.mxu0 0
    %592 = vmatpush.bf16.msra.mxu0 0
    %593 = vmatpush.bf16.msra.mxu0 0
    %594 = vmatpush.bf16.msra.mxu0 0
    %595 = vmatpush.bf16.msra.mxu0 0
    %596 = vmatpush.bf16.msra.mxu0 0
    %597 = vmatpush.bf16.msra.mxu0 %v585
    %598 = vmatpush.bf16.msra.mxu0 %v584
    %599 = vmatmul.bf16.gmra.mxu0 %v589
    %v600 = vpop.f32.mrf.mxu0
    %v601 = vadd.f32 %v574, %v600
    %v602 = vpop.f32.mrf.mxu0
    %v603 = vadd.f32 %v574, %v602
    %604 = vdwg.mxu0
    %v605 = vpack.c.bf16 %v603, %v601
    %607 = vrot.lane.b32.xlu0 %v605, 96
    %v608 = vpop.permute.xlu0 %607
    %v610 = vsel %vm146, %v605, 0
    %v613 = vsel %vm146, %v608, 0
    %615 = vmatpush.bf16.xpose.msra.mxu0 0
    %616 = vmatpush.bf16.xpose.msra.mxu0 0
    %617 = vmatpush.bf16.xpose.msra.mxu0 0
    %618 = vmatpush.bf16.xpose.msra.mxu0 0
    %619 = vmatpush.bf16.xpose.msra.mxu0 0
    %620 = vmatpush.bf16.xpose.msra.mxu0 0
    %621 = vmatpush.bf16.xpose.msra.mxu0 0
    %622 = vmatpush.bf16.xpose.msra.mxu0 %v613
    %623 = vmatmul.bf16.gmra.mxu0 %v610
    %v624 = vpop.f32.mrf.mxu0
    %v625 = vadd.f32 %v42, %v624
    %v626 = vpop.f32.mrf.mxu0
    %v627 = vadd.f32 %v43, %v626
    %628 = vdwg.mxu0
    %v629 = vsel %vm146, %v625, -inf
    %630 = vmax.xlane.f32.xlu0 %v629
    %v631 = vpop.xlane.xlu0 %630
    %v632 = vsel %vm146, %v627, -inf
    %633 = vmax.xlane.f32.xlu0 %v632
    %v634 = vpop.xlane.xlu0 %633
    %v635 = vsub.f32 %v625, %v631
    %v636 = vsub.f32 %v627, %v634
    %v637 = vmul.f32 %v635, 1.442695
    %v638 = vpow.pop %v637
    %v639 = vmul.f32 %v636, 1.442695
    %v640 = vpow.pop %v639
    %v641 = vsel %vm146, %v638, 0.0
    %642 = vadd.xlane.f32.xlu0 %v641
    %v643 = vpop.xlane.xlu0 %642
    %v644 = vsel %vm146, %v640, 0.0
    %645 = vadd.xlane.f32.xlu0 %v644
    %v646 = vpop.xlane.xlu0 %645
    %v647 = vrcp.pop %v643
    %v648 = vrcp.pop %v646
    %v649 = vmul.f32 %v638, %v647
    %v650 = vmul.f32 %v640, %v648
    %v651 = vpack.c.bf16 %v650, %v649
    %652 = vrot.lane.b32.xlu0 %v605, 64
    %v653 = vpop.permute.xlu0 %652
    %v656 = vsel %vm146, %v651, 0
    %658 = vmatpush.bf16.msra.mxu0 0
    %659 = vmatpush.bf16.msra.mxu0 0
    %660 = vmatpush.bf16.msra.mxu0 0
    %661 = vmatpush.bf16.msra.mxu0 0
    %662 = vmatpush.bf16.msra.mxu0 0
    %663 = vmatpush.bf16.msra.mxu0 0
    %664 = vmatpush.bf16.msra.mxu0 0
    %665 = vmatpush.bf16.msra.mxu0 %v653
    %666 = vmatmul.bf16.gmra.mxu0 %v656
    %v667 = vpop.f32.mrf.mxu0
    %v668 = vadd.f32 0.0, %v667
    %v669 = vpop.f32.mrf.mxu0
    %v670 = vadd.f32 0.0, %v669
    %671 = vdwg.mxu0
    %672 = vrot.lane.b32.xlu0 %v605, 112
    %v673 = vpop.permute.xlu0 %672
    %674 = vrot.lane.b32.xlu0 %v605, 80
    %v675 = vpop.permute.xlu0 %674
    %v677 = vsel %vm146, %v673, 0
    %v680 = vsel %vm146, %v675, 0
    %682 = vmatpush.bf16.xpose.msra.mxu0 0
    %683 = vmatpush.bf16.xpose.msra.mxu0 0
    %684 = vmatpush.bf16.xpose.msra.mxu0 0
    %685 = vmatpush.bf16.xpose.msra.mxu0 0
    %686 = vmatpush.bf16.xpose.msra.mxu0 0
    %687 = vmatpush.bf16.xpose.msra.mxu0 0
    %688 = vmatpush.bf16.xpose.msra.mxu0 0
    %689 = vmatpush.bf16.xpose.msra.mxu0 %v680
    %690 = vmatmul.bf16.gmra.mxu0 %v677
    %v691 = vpop.f32.mrf.mxu0
    %v692 = vadd.f32 %v42, %v691
    %v693 = vpop.f32.mrf.mxu0
    %v694 = vadd.f32 %v43, %v693
    %695 = vdwg.mxu0
    %v696 = vsel %vm146, %v692, -inf
    %697 = vmax.xlane.f32.xlu0 %v696
    %v698 = vpop.xlane.xlu0 %697
    %v699 = vsel %vm146, %v694, -inf
    %700 = vmax.xlane.f32.xlu0 %v699
    %v701 = vpop.xlane.xlu0 %700
    %v702 = vsub.f32 %v692, %v698
    %v703 = vsub.f32 %v694, %v701
    %v704 = vmul.f32 %v702, 1.442695
    %v705 = vpow.pop %v704
    %v706 = vmul.f32 %v703, 1.442695
    %v707 = vpow.pop %v706
    %v708 = vsel %vm146, %v705, 0.0
    %709 = vadd.xlane.f32.xlu0 %v708
    %v710 = vpop.xlane.xlu0 %709
    %v711 = vsel %vm146, %v707, 0.0
    %712 = vadd.xlane.f32.xlu0 %v711
    %v713 = vpop.xlane.xlu0 %712
    %v714 = vrcp.pop %v710
    %v715 = vrcp.pop %v713
    %v716 = vmul.f32 %v705, %v714
    %v717 = vmul.f32 %v707, %v715
    %v718 = vpack.c.bf16 %v717, %v716
    %719 = vrot.lane.b32.xlu0 %v605, 48
    %v720 = vpop.permute.xlu0 %719
    %v723 = vsel %vm146, %v718, 0
    %725 = vmatpush.bf16.msra.mxu0 0
    %726 = vmatpush.bf16.msra.mxu0 0
    %727 = vmatpush.bf16.msra.mxu0 0
    %728 = vmatpush.bf16.msra.mxu0 0
    %729 = vmatpush.bf16.msra.mxu0 0
    %730 = vmatpush.bf16.msra.mxu0 0
    %731 = vmatpush.bf16.msra.mxu0 0
    %732 = vmatpush.bf16.msra.mxu0 %v720
    %733 = vmatmul.bf16.gmra.mxu0 %v723
    %v734 = vpop.f32.mrf.mxu0
    %v735 = vadd.f32 0.0, %v734
    %v736 = vpop.f32.mrf.mxu0
    %v737 = vadd.f32 0.0, %v736
    %738 = vdwg.mxu0
    %741 = vrot.lane.b32.xlu0 %v735, 16
    %v742 = vpop.permute.xlu0 %741
    %743 = vrot.lane.b32.xlu0 %v737, 16
    %v744 = vpop.permute.xlu0 %743
    %v747 = vsel %vm146, %v668, %v742
    %v748 = vsel %vm146, %v670, %v744
    %v749 = vpack.c.bf16 %v748, %v747
    %s750 = scalar_lea.vmem %s6, 16
    %v751 = vld [vmem:[%s750] sm:$0xf]
    %v752 = vld [vmem:[%s750 + $0x4] sm:$0xf]
    %v753 = vld [vmem:[%s750 + $0x8] sm:$0xf]
    %v754 = vld [vmem:[%s750 + $0xc] sm:$0xf]
    %v755 = vperm.slane %v512, 2
    %v760 = vunpack.c.l.b16 %v751
    %v761 = vunpack.c.l.b16 %v752
    %v762 = vunpack.c.l.b16 %v753
    %v763 = vunpack.c.l.b16 %v754
    %v764 = vpack.c.b16 %v761, %v760
    %v765 = vpack.c.b16 %v763, %v762
    %v769 = vsel %vm47, %v749, 0
    %771 = vmatpush.bf16.msra.mxu0 0
    %772 = vmatpush.bf16.msra.mxu0 0
    %773 = vmatpush.bf16.msra.mxu0 0
    %774 = vmatpush.bf16.msra.mxu0 0
    %775 = vmatpush.bf16.msra.mxu0 0
    %776 = vmatpush.bf16.msra.mxu0 0
    %777 = vmatpush.bf16.msra.mxu0 %v765
    %778 = vmatpush.bf16.msra.mxu0 %v764
    %779 = vmatmul.bf16.gmra.mxu0 %v769
    %v780 = vpop.f32.mrf.mxu0
    %v781 = vadd.f32 %v755, %v780
    %v782 = vpop.f32.mrf.mxu0
    %v783 = vadd.f32 %v755, %v782
    %784 = vdwg.mxu0
    %v785 = vadd.f32 %v509, %v781
    %v786 = vadd.f32 %v510, %v783
    %v787 = vsel %vm47, %v785, 0.0
    %788 = vadd.xlane.f32.xlu0 %v787
    %v789 = vpop.xlane.xlu0 %788
    %v790 = vsel %vm47, %v786, 0.0
    %791 = vadd.xlane.f32.xlu0 %v790
    %v792 = vpop.xlane.xlu0 %791
    %v793 = vmul.f32 %v789, %v60
    %v794 = vmul.f32 %v792, %v60
    %v795 = vsub.f32 %v785, %v793
    %v796 = vsub.f32 %v786, %v794
    %v797 = vmul.f32 %v795, %v795
    %v798 = vmul.f32 %v796, %v796
    %v799 = vsel %vm47, %v797, 0.0
    %800 = vadd.xlane.f32.xlu0 %v799
    %v801 = vpop.xlane.xlu0 %800
    %v802 = vsel %vm47, %v798, 0.0
    %803 = vadd.xlane.f32.xlu0 %v802
    %v804 = vpop.xlane.xlu0 %803
    %v805 = vmul.f32 %v801, %v60
    %v806 = vmul.f32 %v804, %v60
    %v807 = vadd.f32 %v805, 1e-05
    %v808 = vadd.f32 %v806, 1e-05
    %v809 = vrsqrt.pop %v807
    %v810 = vmul.f32 %v809, %v807
    %v811 = vmul.f32 %v810, %v809
    %v812 = vmul.f32 0.5, %v811
    %v813 = vsub.f32 1.5, %v812
    %v814 = vmul.f32 %v809, %v813
    %vm815 = vweird.f32 %v807
    %vm816 = vweird.f32 %v809
    %vm817 = vmor %vm815, %vm816
    %v818 = vsel %vm817, %v809, %v814
    %v819 = vrsqrt.pop %v808
    %v820 = vmul.f32 %v819, %v808
    %v821 = vmul.f32 %v820, %v819
    %v822 = vmul.f32 0.5, %v821
    %v823 = vsub.f32 1.5, %v822
    %v824 = vmul.f32 %v819, %v823
    %vm825 = vweird.f32 %v808
    %vm826 = vweird.f32 %v819
    %vm827 = vmor %vm825, %vm826
    %v828 = vsel %vm827, %v819, %v824
    %v829 = vmul.f32 %v795, %v818
    %v830 = vmul.f32 %v796, %v828
    %v831 = vperm.slane %v512, 3
    %v832 = vmul.f32 %v829, %v831
    %v833 = vmul.f32 %v830, %v831
    %v834 = vperm.slane %v512, 4
    %v835 = vadd.f32 %v832, %v834
    %v836 = vadd.f32 %v833, %v834
    %v837 = vpack.c.bf16 %v836, %v835
    %s838 = scalar_lea.vmem %s7, 16
    %v839 = vld [vmem:[%s838] sm:$0xf]
    %v840 = vld [vmem:[%s838 + $0x4] sm:$0xf]
    %v841 = vld [vmem:[%s838 + $0x8] sm:$0xf]
    %v842 = vld [vmem:[%s838 + $0xc] sm:$0xf]
    %v844 = vperm.slane %v516, 0
    %v850 = vunpack.c.l.b16 %v839
    %v851 = vunpack.c.l.b16 %v840
    %v852 = vunpack.c.l.b16 %v841
    %v853 = vunpack.c.l.b16 %v842
    %v854 = vpack.c.b16 %v851, %v850
    %v855 = vpack.c.b16 %v853, %v852
    %v859 = vsel %vm47, %v837, 0
    %861 = vmatpush.bf16.msra.mxu0 0
    %862 = vmatpush.bf16.msra.mxu0 0
    %863 = vmatpush.bf16.msra.mxu0 0
    %864 = vmatpush.bf16.msra.mxu0 0
    %865 = vmatpush.bf16.msra.mxu0 0
    %866 = vmatpush.bf16.msra.mxu0 0
    %867 = vmatpush.bf16.msra.mxu0 %v855
    %868 = vmatpush.bf16.msra.mxu0 %v854
    %869 = vmatmul.bf16.gmra.mxu0 %v859
    %v870 = vpop.f32.mrf.mxu0
    %v871 = vadd.f32 %v844, %v870
    %v872 = vpop.f32.mrf.mxu0
    %v873 = vadd.f32 %v844, %v872
    %874 = vdwg.mxu0
    %v875 = vmul.f32 %v871, 0.5
    %v876 = vmul.f32 %v873, 0.5
    %v877 = vmul.f32 %v871, 0.044715
    %v878 = vmul.f32 %v873, 0.044715
    %v879 = vmul.f32 %v877, %v871
    %v880 = vmul.f32 %v878, %v873
    %v881 = vmul.f32 %v879, %v871
    %v882 = vmul.f32 %v880, %v873
    %v883 = vadd.f32 %v871, %v881
    %v884 = vadd.f32 %v873, %v882
    %v885 = vmul.f32 %v883, 0.7978846
    %v886 = vmul.f32 %v884, 0.7978846
    %v887 = vtanh.pop %v885
    %v888 = vtanh.pop %v886
    %v889 = vadd.f32 %v887, 1.0
    %v890 = vadd.f32 %v888, 1.0
    %v891 = vmul.f32 %v875, %v889
    %v892 = vmul.f32 %v876, %v890
    %v893 = vpack.c.bf16 %v892, %v891
    %s894 = scalar_lea.vmem %s8, 64
    %v895 = vld [vmem:[%s894] sm:$0xf]
    %v896 = vld [vmem:[%s894 + $0x4] sm:$0xf]
    %v897 = vld [vmem:[%s894 + $0x8] sm:$0xf]
    %v898 = vld [vmem:[%s894 + $0xc] sm:$0xf]
    %v899 = vld [vmem:[%s894 + $0x10] sm:$0xf]
    %v900 = vld [vmem:[%s894 + $0x14] sm:$0xf]
    %v901 = vld [vmem:[%s894 + $0x18] sm:$0xf]
    %v902 = vld [vmem:[%s894 + $0x1c] sm:$0xf]
    %v903 = vld [vmem:[%s894 + $0x20] sm:$0xf]
    %v904 = vld [vmem:[%s894 + $0x24] sm:$0xf]
    %v905 = vld [vmem:[%s894 + $0x28] sm:$0xf]
    %v906 = vld [vmem:[%s894 + $0x2c] sm:$0xf]
    %v907 = vld [vmem:[%s894 + $0x30] sm:$0xf]
    %v908 = vld [vmem:[%s894 + $0x34] sm:$0xf]
    %v909 = vld [vmem:[%s894 + $0x38] sm:$0xf]
    %v910 = vld [vmem:[%s894 + $0x3c] sm:$0xf]
    %v911 = vperm.slane %v512, 5
    %v928 = vunpack.c.l.b16 %v895
    %v929 = vunpack.c.l.b16 %v896
    %v930 = vunpack.c.l.b16 %v897
    %v931 = vunpack.c.l.b16 %v898
    %v932 = vunpack.c.l.b16 %v899
    %v933 = vunpack.c.l.b16 %v900
    %v934 = vunpack.c.l.b16 %v901
    %v935 = vunpack.c.l.b16 %v902
    %v936 = vunpack.c.l.b16 %v903
    %v937 = vunpack.c.l.b16 %v904
    %v938 = vunpack.c.l.b16 %v905
    %v939 = vunpack.c.l.b16 %v906
    %v940 = vunpack.c.l.b16 %v907
    %v941 = vunpack.c.l.b16 %v908
    %v942 = vunpack.c.l.b16 %v909
    %v943 = vunpack.c.l.b16 %v910
    %v944 = vpack.c.b16 %v929, %v928
    %v945 = vpack.c.b16 %v931, %v930
    %v946 = vpack.c.b16 %v933, %v932
    %v947 = vpack.c.b16 %v935, %v934
    %v948 = vpack.c.b16 %v937, %v936
    %v949 = vpack.c.b16 %v939, %v938
    %v950 = vpack.c.b16 %v941, %v940
    %v951 = vpack.c.b16 %v943, %v942
    %960 = vmatpush.bf16.msra.mxu0 %v951
    %961 = vmatpush.bf16.msra.mxu0 %v950
    %962 = vmatpush.bf16.msra.mxu0 %v949
    %963 = vmatpush.bf16.msra.mxu0 %v948
    %964 = vmatpush.bf16.msra.mxu0 %v947
    %965 = vmatpush.bf16.msra.mxu0 %v946
    %966 = vmatpush.bf16.msra.mxu0 %v945
    %967 = vmatpush.bf16.msra.mxu0 %v944
    %968 = vmatmul.bf16.gmra.mxu0 %v893
    %v969 = vpop.f32.mrf.mxu0
    %v970 = vadd.f32 %v911, %v969
    %v971 = vpop.f32.mrf.mxu0
    %v972 = vadd.f32 %v911, %v971
    %973 = vdwg.mxu0
    %v974 = vadd.f32 %v785, %v970
    %v975 = vadd.f32 %v786, %v972
    %v977 = vrot.slane %v974, 7
    %v980 = vrot.slane %v975, 6
    %vm982 = vcmask 1040384
    %v983 = vsel %vm982, %v977, %v980
    %v984 = vld [vmem:[%s9] sm:$0x3]
    %vm985 = vcmask 254976
    %v986 = vsel %vm985, %v983, 0.0
    %987 = vadd.xlane.f32.xlu0 %v986
    %v988 = vpop.xlane.xlu0 %987
    %v989 = vmul.f32 %v988, %v60
    %v990 = vsub.f32 %v983, %v989
    %v991 = vmul.f32 %v990, %v990
    %v992 = vsel %vm985, %v991, 0.0
    %993 = vadd.xlane.f32.xlu0 %v992
    %v994 = vpop.xlane.xlu0 %993
    %v995 = vmul.f32 %v994, %v60
    %v996 = vadd.f32 %v995, 1e-05
    %v997 = vrsqrt.pop %v996
    %v998 = vmul.f32 %v997, %v996
    %v999 = vmul.f32 %v998, %v997
    %v1000 = vmul.f32 0.5, %v999
    %v1001 = vsub.f32 1.5, %v1000
    %v1002 = vmul.f32 %v997, %v1001
    %vm1003 = vweird.f32 %v996
    %vm1004 = vweird.f32 %v997
    %vm1005 = vmor %vm1003, %vm1004
    %v1006 = vsel %vm1005, %v997, %v1002
    %v1007 = vmul.f32 %v990, %v1006
    %v1008 = vperm.slane %v984, 0
    %v1009 = vmul.f32 %v1007, %v1008
    %v1010 = vperm.slane %v984, 1
    %v1011 = vadd.f32 %v1009, %v1010
    %v1012 = vpack.c.bf16 %v1011, %v1011
    %v1013 = vld [vmem:[%s10] sm:$0xf]
    %v1014 = vld [vmem:[%s10 + $0x4] sm:$0xf]
    %v1015 = vld [vmem:[%s10 + $0x8] sm:$0xf]
    %v1016 = vld [vmem:[%s10 + $0xc] sm:$0xf]
    %v1021 = vunpack.c.l.b16 %v1013
    %v1022 = vunpack.c.l.b16 %v1014
    %v1023 = vunpack.c.l.b16 %v1015
    %v1024 = vunpack.c.l.b16 %v1016
    %v1025 = vpack.c.b16 %v1022, %v1021
    %v1026 = vpack.c.b16 %v1024, %v1023
    %v1030 = vsel %vm47, %v1012, 0
    %1032 = vmatpush.bf16.msra.mxu0 0
    %1033 = vmatpush.bf16.msra.mxu0 0
    %1034 = vmatpush.bf16.msra.mxu0 0
    %1035 = vmatpush.bf16.msra.mxu0 0
    %1036 = vmatpush.bf16.msra.mxu0 0
    %1037 = vmatpush.bf16.msra.mxu0 0
    %1038 = vmatpush.bf16.msra.mxu0 %v1026
    %1039 = vmatpush.bf16.msra.mxu0 %v1025
    %1040 = vmatmul.bf16.gmra.mxu0 %v1030
    %v1041 = vpop.f32.mrf.mxu0
    %v1042 = vadd.f32 0.0, %v1041
    %v1043 = vpop.f32.mrf.mxu0
    %1044 = vdwg.mxu0
    %1045 = vst [vmem:[#allocation2] sm:$0x3] %v1042
    // Predicated region
    $region46: #{gpt_forward.1} parent=1 // pred_check
      _
    $region47: #{gpt_forward.1} parent=1 // pred_check_branch
      %1047 = sbr.rel (0) target = $region49
    $region48: #{gpt_forward.1} parent=1 // pred_region
      %1049 = vsyncadd [#allocation3], 0
      %s1051 = sshll.u32 [#allocation2], 4
      %s1052 = int_to_ptr.vmem [resolvable:$true] %s1051
      %s1053 = sshll.u32 %s11, 4
      %s1054 = int_to_ptr.hbm [resolvable:$true] %s1053
      %1056 = dma.vmem_to_hbm [thread:$0]  %s1052, 32, %s1054, [#allocation3]
    $region49: #{gpt_forward.1} parent=1 // pred_fallthru
      _
    // Predicated region
    $region50: #{gpt_forward.1} parent=1 // pred_check
      _
    $region51: #{gpt_forward.1} parent=1 // pred_check_branch
      %1058 = sbr.rel (0) target = $region53
    $region52: #{gpt_forward.1} parent=1 // pred_region
      %1060 = dma.done [#allocation3], 32
    $region53: #{gpt_forward.1} parent=1 // pred_fallthru
      _
    %1061 = vsyncpa [#allocation3], 1

</llo_original>
